<compile_context>
chip_gen: v7x
topology: tpu7x:2x2x1
jax: 0.10.0
libtpu: 0.0.40
codegen_flags: <defaults>
</compile_context>

<pallas_src>
import jax
import jax.numpy as jnp
from jax.experimental import pallas as pl
from jax.experimental.pallas import tpu as pltpu

EPS = 1e-3
KH = 3
KW = 3
SUB = 8            # extra rows loaded per kh slab so the +1/+2 kw shifts stay in range


def _make_kernel(n_batch, h, w, wp, cin, cout, tm):
    inv_count = 1.0 / float(n_batch * h * w)
    wp_pow2 = (wp & (wp - 1)) == 0

    def kernel(x_ref, w_ref, g_ref, b_ref, o_ref, conv_ref, s1_ref, s2_ref):
        p = pl.program_id(0)          # 0: conv + stats, 1: normalize + ReLU
        t = pl.program_id(1)          # tile index over the "wide" output rows
        row0 = pl.multiple_of(t * tm, 8)

        @pl.when(p == 0)
        def _conv_and_stats():
            @pl.when(t == 0)
            def _():
                s1_ref[...] = jnp.zeros_like(s1_ref)
                s2_ref[...] = jnp.zeros_like(s2_ref)

            # Wide-row r maps to output column w' = r % wp; only w' < w are real
            # conv outputs.  The padded columns are excluded from the BN stats
            # (and zeroed in the stored conv result).  Hoisted out of the n loop.
            local = row0 + jax.lax.broadcasted_iota(jnp.int32, (tm, 1), 0)
            col = jnp.bitwise_and(local, wp - 1) if wp_pow2 else local % wp
            mask = col < w

            for n in range(n_batch):
                acc = jnp.zeros((tm, cout), jnp.float32)
                for kh in range(KH):
                    start = pl.multiple_of(row0 + kh * wp, 8)
                    base = x_ref[n, pl.ds(start, tm + SUB), :]        # f32 slab
                    # Fold the 3 horizontal taps into K: static f32 row shifts
                    # (+0/+1/+2), cast each slice to bf16, lane-concatenate.
                    lhs = jnp.concatenate(
                        [jax.lax.slice_in_dim(base, kw, kw + tm, axis=0)
                             .astype(jnp.bfloat16)
                         for kw in range(KW)],
                        axis=-1)                                      # (tm, KW*cin) bf16
                    acc = acc + jnp.dot(lhs, w_ref[kh, :, :],
                                        preferred_element_type=jnp.float32)
                acc = jnp.where(mask, acc, 0.0)
                conv_ref[n, pl.ds(row0, tm), :] = acc
                s1_ref[...] += jnp.sum(acc, axis=0, keepdims=True)
                s2_ref[...] += jnp.sum(acc * acc, axis=0, keepdims=True)

        @pl.when(p == 1)
        def _normalize_relu():
            mean = s1_ref[...] * inv_count
            var = jnp.maximum(s2_ref[...] * inv_count - mean * mean, 0.0)
            scale = jax.lax.rsqrt(var + EPS) * g_ref[...]
            shift = b_ref[...] - mean * scale
            for n in range(n_batch):
                y = conv_ref[n, pl.ds(row0, tm), :]
                o_ref[n, :, :] = jnp.maximum(y * scale + shift, 0.0)

    return kernel


@jax.jit
def conv_bn_relu(x_nchw, w_oihw, gamma, beta):
    """Fused conv3x3(stride 1, pad 1, no bias) + training-mode BN + ReLU.

    x_nchw: (N, Cin, H, W) f32, w_oihw: (Cout, Cin, 3, 3).  Returns (N, Cout, H, W) f32.
    """
    N, Cin, H, W = x_nchw.shape
    Cout = w_oihw.shape[0]

    Wp = ((W + 2 + 15) // 16) * 16     # padded row width (multiple of 16, >= W+2)
    Hp = H + 3                          # top pad 1 + bottom pad 1 + 1 overrun row
    M_wide = H * Wp                     # "wide" output rows per image

    TM = 128
    while M_wide % TM:
        TM -= 8
    T = M_wide // TM

    # NCHW -> NHWC, zero pad, flatten spatial dims to rows.  Stays f32: the
    # kernel does the kw row-shifts on 32-bit data and casts to bf16 afterwards.
    x = jnp.transpose(x_nchw, (0, 2, 3, 1))                               # (N,H,W,Cin)
    xp = jnp.pad(x, ((0, 0), (1, Hp - H - 1), (1, Wp - W - 1), (0, 0)))   # (N,Hp,Wp,Cin)
    xpf = xp.reshape(N, Hp * Wp, Cin)

    # Weights: (Cout, Cin, kh, kw) -> (kh, kw*Cin, Cout), bf16 for the MXU.
    wt = (jnp.transpose(w_oihw, (2, 3, 1, 0))
             .reshape(KH, KW * Cin, Cout)
             .astype(jnp.bfloat16))

    g = gamma.reshape(1, Cout).astype(jnp.float32)
    bt = beta.reshape(1, Cout).astype(jnp.float32)

    kernel = _make_kernel(N, H, W, Wp, Cin, Cout, TM)

    out_wide = pl.pallas_call(
        kernel,
        out_shape=jax.ShapeDtypeStruct((N, M_wide, Cout), jnp.float32),
        grid_spec=pltpu.PrefetchScalarGridSpec(
            num_scalar_prefetch=0,
            grid=(2, T),                                   # (phase, tile)
            in_specs=[
                # Whole padded input + weights resident in VMEM; constant
                # index_maps => each is DMA'd exactly once at kernel start.
                pl.BlockSpec((N, Hp * Wp, Cin), lambda p, t: (0, 0, 0)),
                pl.BlockSpec((KH, KW * Cin, Cout), lambda p, t: (0, 0, 0)),
                pl.BlockSpec((1, Cout), lambda p, t: (0, 0)),
                pl.BlockSpec((1, Cout), lambda p, t: (0, 0)),
            ],
            # Phase 0 pins the output block index (no garbage write-backs);
            # phase 1 walks the tiles so each tile's write-back overlaps the
            # normalization of the next one.
            out_specs=pl.BlockSpec((N, TM, Cout), lambda p, t: (0, t * p, 0)),
            scratch_shapes=[
                pltpu.VMEM((N, M_wide, Cout), jnp.float32),   # raw conv output
                pltpu.VMEM((1, Cout), jnp.float32),           # sum(y)
                pltpu.VMEM((1, Cout), jnp.float32),           # sum(y*y)
            ],
        ),
        compiler_params=pltpu.CompilerParams(
            dimension_semantics=("arbitrary", "arbitrary"),
        ),
    )(xpf, wt, g, bt)

    # Drop the padded "wide" columns and return NCHW f32 (module semantics).
    # TODO(synk): if downstream can consume NHWC, return before the transpose
    # and skip this layout pass (and consider a bf16 kernel output).
    out = out_wide.reshape(N, H, Wp, Cout)[:, :, :W, :]
    return jnp.transpose(out, (0, 3, 1, 2))


def _reference(x_nchw, w_oihw, gamma, beta):
    y = jax.lax.conv_general_dilated(
        x_nchw, w_oihw, window_strides=(1, 1), padding=((1, 1), (1, 1)),
        dimension_numbers=("NCHW", "OIHW", "NCHW"),
    )
    mean = jnp.mean(y, axis=(0, 2, 3), keepdims=True)
    var = jnp.mean((y - mean) ** 2, axis=(0, 2, 3), keepdims=True)
    yn = (y - mean) * jax.lax.rsqrt(var + EPS)
    yn = yn * gamma.reshape(1, -1, 1, 1) + beta.reshape(1, -1, 1, 1)
    return jnp.maximum(yn, 0.0)


if __name__ == "__main__":
    key = jax.random.PRNGKey(0)
    k_x, k_w, k_g, k_b = jax.random.split(key, 4)

    N, Cin, H, W, Cout = 1, 128, 28, 28, 192
    x = jax.random.normal(k_x, (N, Cin, H, W), dtype=jnp.float32)
    w = jax.random.normal(k_w, (Cout, Cin, 3, 3), dtype=jnp.float32) * 0.05
    gamma = 1.0 + 0.1 * jax.random.normal(k_g, (Cout,), dtype=jnp.float32)
    beta = 0.1 * jax.random.normal(k_b, (Cout,), dtype=jnp.float32)

    out = conv_bn_relu(x, w, gamma, beta)
    out = jax.block_until_ready(out)

    ref = _reference(x, w, gamma, beta)
    assert out.shape == (N, Cout, H, W)
    # bf16 MXU operands with f32 accumulation over K=1152 -> slightly looser
    # tolerance than a pure-f32 comparison.
    assert jnp.allclose(out, ref, atol=2e-2, rtol=2e-2), float(
        jnp.max(jnp.abs(out - ref)))
    print("KERNEL_OK")
</pallas_src>

<mosaic_0001>
module attributes {stable_mosaic.version = 11 : i64} {
  func.func @kernel(%arg0: i32, %arg1: i32, %arg2: memref<1x992x128xf32, #tpu.memory_space<vmem>>, %arg3: memref<3x384x192xbf16, #tpu.memory_space<vmem>>, %arg4: memref<1x192xf32, #tpu.memory_space<vmem>>, %arg5: memref<1x192xf32, #tpu.memory_space<vmem>>, %arg6: memref<1x128x192xf32, #tpu.memory_space<vmem>>, %arg7: memref<1x896x192xf32, #tpu.memory_space<vmem>>, %arg8: memref<1x192xf32, #tpu.memory_space<vmem>>, %arg9: memref<1x192xf32, #tpu.memory_space<vmem>>) attributes {dimension_semantics = [#tpu.dimension_semantics<arbitrary>, #tpu.dimension_semantics<arbitrary>], iteration_bounds = array<i64: 2, 7>, scalar_prefetch = 0 : i64, scratch_operands = 3 : i64, tpu.core_type = #tpu.core_type<tc>, window_params = [{pipeline_mode = #tpu.pipeline_mode<synchronous>, transform_indices = @transform_0, window_bounds = array<i64: 1, 992, 128>}, {pipeline_mode = #tpu.pipeline_mode<synchronous>, transform_indices = @transform_1, window_bounds = array<i64: 3, 384, 192>}, {pipeline_mode = #tpu.pipeline_mode<synchronous>, transform_indices = @transform_2, window_bounds = array<i64: 1, 192>}, {pipeline_mode = #tpu.pipeline_mode<synchronous>, transform_indices = @transform_3, window_bounds = array<i64: 1, 192>}, {transform_indices = @transform_4, window_bounds = array<i64: 1, 128, 192>}]} {
    %c128_i32 = arith.constant 128 : i32
    %0 = arith.muli %arg1, %c128_i32 : i32
    %1 = tpu.assume_multiple %0, 8 : i32
    %c0_i32 = arith.constant 0 : i32
    %2 = arith.cmpi eq, %arg0, %c0_i32 : i32
    %3 = arith.extui %2 : i1 to i32
    %c0_i32_0 = arith.constant 0 : i32
    %4 = arith.cmpi ne, %3, %c0_i32_0 : i32
    scf.if %4 {
      %c0_i32_2 = arith.constant 0 : i32
      %8 = arith.cmpi eq, %arg1, %c0_i32_2 : i32
      %9 = arith.extui %8 : i1 to i32
      %c0_i32_3 = arith.constant 0 : i32
      %10 = arith.cmpi ne, %9, %c0_i32_3 : i32
      scf.if %10 {
        %cst_33 = arith.constant 0.000000e+00 : f32
        %86 = vector.broadcast %cst_33 : f32 to vector<1x192xf32>
        %c0_34 = arith.constant 0 : index
        %c0_35 = arith.constant 0 : index
        %87 = vector.load %arg8[%c0_34, %c0_35] : memref<1x192xf32, #tpu.memory_space<vmem>>, vector<1x192xf32>
        tpu.vector_store %arg8[%c0_34, %c0_35], %86 {strides = array<i32>} : memref<1x192xf32, #tpu.memory_space<vmem>>, vector<1x192xf32>,
        %cst_36 = arith.constant 0.000000e+00 : f32
        %88 = vector.broadcast %cst_36 : f32 to vector<1x192xf32>
        %c0_37 = arith.constant 0 : index
        %c0_38 = arith.constant 0 : index
        %89 = vector.load %arg9[%c0_37, %c0_38] : memref<1x192xf32, #tpu.memory_space<vmem>>, vector<1x192xf32>
        tpu.vector_store %arg9[%c0_37, %c0_38], %88 {strides = array<i32>} : memref<1x192xf32, #tpu.memory_space<vmem>>, vector<1x192xf32>,
      } else {
      }
      %11 = tpu.iota {dimensions = array<i32: 0>} : vector<128x1xi32>
      %12 = vector.broadcast %1 : i32 to vector<128x1xi32>
      %13 = arith.addi %12, %11 : vector<128x1xi32>
      %c31_i32 = arith.constant 31 : i32
      %14 = vector.broadcast %c31_i32 : i32 to vector<128x1xi32>
      %15 = arith.andi %13, %14 : vector<128x1xi32>
      %c28_i32 = arith.constant 28 : i32
      %16 = vector.broadcast %c28_i32 : i32 to vector<128x1xi32>
      %17 = arith.cmpi slt, %15, %16 : vector<128x1xi32>
      %cst = arith.constant 0.000000e+00 : f32
      %18 = vector.broadcast %cst : f32 to vector<128x192xf32>
      %c0_i32_4 = arith.constant 0 : i32
      %19 = arith.addi %1, %c0_i32_4 : i32
      %20 = tpu.assume_multiple %19, 8 : i32
      %c0 = arith.constant 0 : index
      %21 = arith.index_cast %20 : i32 to index
      %c0_5 = arith.constant 0 : index
      %22 = vector.load %arg2[%c0, %21, %c0_5] : memref<1x992x128xf32, #tpu.memory_space<vmem>>, vector<1x136x128xf32>
      %23 = vector.shape_cast %22 : vector<1x136x128xf32> to vector<136x128xf32>
      %24 = vector.extract_strided_slice %23 {offsets = [0, 0], sizes = [128, 128], strides = [1, 1]} : vector<136x128xf32> to vector<128x128xf32>
      %25 = arith.truncf %24 : vector<128x128xf32> to vector<128x128xbf16>
      %26 = vector.extract_strided_slice %23 {offsets = [1, 0], sizes = [128, 128], strides = [1, 1]} : vector<136x128xf32> to vector<128x128xf32>
      %27 = arith.truncf %26 : vector<128x128xf32> to vector<128x128xbf16>
      %28 = vector.extract_strided_slice %23 {offsets = [2, 0], sizes = [128, 128], strides = [1, 1]} : vector<136x128xf32> to vector<128x128xf32>
      %29 = arith.truncf %28 : vector<128x128xf32> to vector<128x128xbf16>
      %30 = tpu.concatenate %25, %27, %29 in 1 : vector<128x128xbf16>, vector<128x128xbf16>, vector<128x128xbf16> -> vector<128x384xbf16>
      %c0_6 = arith.constant 0 : index
      %c0_7 = arith.constant 0 : index
      %c0_8 = arith.constant 0 : index
      %31 = vector.load %arg3[%c0_6, %c0_7, %c0_8] : memref<3x384x192xbf16, #tpu.memory_space<vmem>>, vector<1x384x192xbf16>
      %32 = vector.shape_cast %31 : vector<1x384x192xbf16> to vector<384x192xbf16>
      %cst_9 = arith.constant dense<0.000000e+00> : vector<128x192xf32>
      %33 = tpu.matmul %30, %32, %cst_9 {dimension_numbers = #tpu.dot_dimension_numbers<[1], [0], [0], [1], [0, 0, 1, 1], [], []>} : vector<128x384xbf16>, vector<384x192xbf16>, vector<128x192xf32> -> vector<128x192xf32>
      %34 = arith.addf %18, %33 : vector<128x192xf32>
      %c32_i32 = arith.constant 32 : i32
      %35 = arith.addi %1, %c32_i32 : i32
      %36 = tpu.assume_multiple %35, 8 : i32
      %c0_10 = arith.constant 0 : index
      %37 = arith.index_cast %36 : i32 to index
      %c0_11 = arith.constant 0 : index
      %38 = vector.load %arg2[%c0_10, %37, %c0_11] : memref<1x992x128xf32, #tpu.memory_space<vmem>>, vector<1x136x128xf32>
      %39 = vector.shape_cast %38 : vector<1x136x128xf32> to vector<136x128xf32>
      %40 = vector.extract_strided_slice %39 {offsets = [0, 0], sizes = [128, 128], strides = [1, 1]} : vector<136x128xf32> to vector<128x128xf32>
      %41 = arith.truncf %40 : vector<128x128xf32> to vector<128x128xbf16>
      %42 = vector.extract_strided_slice %39 {offsets = [1, 0], sizes = [128, 128], strides = [1, 1]} : vector<136x128xf32> to vector<128x128xf32>
      %43 = arith.truncf %42 : vector<128x128xf32> to vector<128x128xbf16>
      %44 = vector.extract_strided_slice %39 {offsets = [2, 0], sizes = [128, 128], strides = [1, 1]} : vector<136x128xf32> to vector<128x128xf32>
      %45 = arith.truncf %44 : vector<128x128xf32> to vector<128x128xbf16>
      %46 = tpu.concatenate %41, %43, %45 in 1 : vector<128x128xbf16>, vector<128x128xbf16>, vector<128x128xbf16> -> vector<128x384xbf16>
      %c1 = arith.constant 1 : index
      %c0_12 = arith.constant 0 : index
      %c0_13 = arith.constant 0 : index
      %47 = vector.load %arg3[%c1, %c0_12, %c0_13] : memref<3x384x192xbf16, #tpu.memory_space<vmem>>, vector<1x384x192xbf16>
      %48 = vector.shape_cast %47 : vector<1x384x192xbf16> to vector<384x192xbf16>
      %cst_14 = arith.constant dense<0.000000e+00> : vector<128x192xf32>
      %49 = tpu.matmul %46, %48, %cst_14 {dimension_numbers = #tpu.dot_dimension_numbers<[1], [0], [0], [1], [0, 0, 1, 1], [], []>} : vector<128x384xbf16>, vector<384x192xbf16>, vector<128x192xf32> -> vector<128x192xf32>
      %50 = arith.addf %34, %49 : vector<128x192xf32>
      %c64_i32 = arith.constant 64 : i32
      %51 = arith.addi %1, %c64_i32 : i32
      %52 = tpu.assume_multiple %51, 8 : i32
      %c0_15 = arith.constant 0 : index
      %53 = arith.index_cast %52 : i32 to index
      %c0_16 = arith.constant 0 : index
      %54 = vector.load %arg2[%c0_15, %53, %c0_16] : memref<1x992x128xf32, #tpu.memory_space<vmem>>, vector<1x136x128xf32>
      %55 = vector.shape_cast %54 : vector<1x136x128xf32> to vector<136x128xf32>
      %56 = vector.extract_strided_slice %55 {offsets = [0, 0], sizes = [128, 128], strides = [1, 1]} : vector<136x128xf32> to vector<128x128xf32>
      %57 = arith.truncf %56 : vector<128x128xf32> to vector<128x128xbf16>
      %58 = vector.extract_strided_slice %55 {offsets = [1, 0], sizes = [128, 128], strides = [1, 1]} : vector<136x128xf32> to vector<128x128xf32>
      %59 = arith.truncf %58 : vector<128x128xf32> to vector<128x128xbf16>
      %60 = vector.extract_strided_slice %55 {offsets = [2, 0], sizes = [128, 128], strides = [1, 1]} : vector<136x128xf32> to vector<128x128xf32>
      %61 = arith.truncf %60 : vector<128x128xf32> to vector<128x128xbf16>
      %62 = tpu.concatenate %57, %59, %61 in 1 : vector<128x128xbf16>, vector<128x128xbf16>, vector<128x128xbf16> -> vector<128x384xbf16>
      %c2 = arith.constant 2 : index
      %c0_17 = arith.constant 0 : index
      %c0_18 = arith.constant 0 : index
      %63 = vector.load %arg3[%c2, %c0_17, %c0_18] : memref<3x384x192xbf16, #tpu.memory_space<vmem>>, vector<1x384x192xbf16>
      %64 = vector.shape_cast %63 : vector<1x384x192xbf16> to vector<384x192xbf16>
      %cst_19 = arith.constant dense<0.000000e+00> : vector<128x192xf32>
      %65 = tpu.matmul %62, %64, %cst_19 {dimension_numbers = #tpu.dot_dimension_numbers<[1], [0], [0], [1], [0, 0, 1, 1], [], []>} : vector<128x384xbf16>, vector<384x192xbf16>, vector<128x192xf32> -> vector<128x192xf32>
      %66 = arith.addf %50, %65 : vector<128x192xf32>
      %cst_20 = arith.constant 0.000000e+00 : f32
      %67 = vector.shape_cast %17 : vector<128x1xi1> to vector<128x1xi1>
      %68 = vector.broadcast %67 : vector<128x1xi1> to vector<128x192xi1>
      %69 = vector.broadcast %cst_20 : f32 to vector<128x192xf32>
      %70 = arith.select %68, %66, %69 : vector<128x192xi1>, vector<128x192xf32>
      %c0_21 = arith.constant 0 : index
      %71 = arith.index_cast %1 : i32 to index
      %c0_22 = arith.constant 0 : index
      %72 = vector.load %arg7[%c0_21, %71, %c0_22] : memref<1x896x192xf32, #tpu.memory_space<vmem>>, vector<1x128x192xf32>
      %73 = vector.shape_cast %72 : vector<1x128x192xf32> to vector<128x192xf32>
      %74 = vector.shape_cast %70 : vector<128x192xf32> to vector<1x128x192xf32>
      tpu.vector_store %arg7[%c0_21, %71, %c0_22], %74 {strides = array<i32>} : memref<1x896x192xf32, #tpu.memory_space<vmem>>, vector<1x128x192xf32>,
      %c0_23 = arith.constant 0 : index
      %c0_24 = arith.constant 0 : index
      %75 = vector.load %arg8[%c0_23, %c0_24] : memref<1x192xf32, #tpu.memory_space<vmem>>, vector<1x192xf32>
      %cst_25 = arith.constant dense<0.000000e+00> : vector<192xf32>
      %76 = vector.multi_reduction <add>, %70, %cst_25 [0] : vector<128x192xf32> to vector<192xf32>
      %77 = vector.shape_cast %76 : vector<192xf32> to vector<1x192xf32>
      %78 = arith.addf %75, %77 : vector<1x192xf32>
      %c0_26 = arith.constant 0 : index
      %c0_27 = arith.constant 0 : index
      %79 = vector.load %arg8[%c0_26, %c0_27] : memref<1x192xf32, #tpu.memory_space<vmem>>, vector<1x192xf32>
      tpu.vector_store %arg8[%c0_26, %c0_27], %78 {strides = array<i32>} : memref<1x192xf32, #tpu.memory_space<vmem>>, vector<1x192xf32>,
      %c0_28 = arith.constant 0 : index
      %c0_29 = arith.constant 0 : index
      %80 = vector.load %arg9[%c0_28, %c0_29] : memref<1x192xf32, #tpu.memory_space<vmem>>, vector<1x192xf32>
      %81 = arith.mulf %70, %70 : vector<128x192xf32>
      %cst_30 = arith.constant dense<0.000000e+00> : vector<192xf32>
      %82 = vector.multi_reduction <add>, %81, %cst_30 [0] : vector<128x192xf32> to vector<192xf32>
      %83 = vector.shape_cast %82 : vector<192xf32> to vector<1x192xf32>
      %84 = arith.addf %80, %83 : vector<1x192xf32>
      %c0_31 = arith.constant 0 : index
      %c0_32 = arith.constant 0 : index
      %85 = vector.load %arg9[%c0_31, %c0_32] : memref<1x192xf32, #tpu.memory_space<vmem>>, vector<1x192xf32>
      tpu.vector_store %arg9[%c0_31, %c0_32], %84 {strides = array<i32>} : memref<1x192xf32, #tpu.memory_space<vmem>>, vector<1x192xf32>,
    } else {
    }
    %c1_i32 = arith.constant 1 : i32
    %5 = arith.cmpi eq, %arg0, %c1_i32 : i32
    %6 = arith.extui %5 : i1 to i32
    %c0_i32_1 = arith.constant 0 : i32
    %7 = arith.cmpi ne, %6, %c0_i32_1 : i32
    scf.if %7 {
      %c0 = arith.constant 0 : index
      %c0_2 = arith.constant 0 : index
      %8 = vector.load %arg8[%c0, %c0_2] : memref<1x192xf32, #tpu.memory_space<vmem>>, vector<1x192xf32>
      %cst = arith.constant 0.00127551018 : f32
      %9 = vector.broadcast %cst : f32 to vector<1x192xf32>
      %10 = arith.mulf %8, %9 : vector<1x192xf32>
      %c0_3 = arith.constant 0 : index
      %c0_4 = arith.constant 0 : index
      %11 = vector.load %arg9[%c0_3, %c0_4] : memref<1x192xf32, #tpu.memory_space<vmem>>, vector<1x192xf32>
      %cst_5 = arith.constant 0.00127551018 : f32
      %12 = vector.broadcast %cst_5 : f32 to vector<1x192xf32>
      %13 = arith.mulf %11, %12 : vector<1x192xf32>
      %14 = arith.mulf %10, %10 : vector<1x192xf32>
      %15 = arith.subf %13, %14 : vector<1x192xf32>
      %cst_6 = arith.constant 0.000000e+00 : f32
      %16 = vector.broadcast %cst_6 : f32 to vector<1x192xf32>
      %17 = arith.maximumf %15, %16 : vector<1x192xf32>
      %cst_7 = arith.constant 1.000000e-03 : f32
      %18 = vector.broadcast %cst_7 : f32 to vector<1x192xf32>
      %19 = arith.addf %17, %18 : vector<1x192xf32>
      %20 = math.rsqrt %19 : vector<1x192xf32>
      %c0_8 = arith.constant 0 : index
      %c0_9 = arith.constant 0 : index
      %21 = vector.load %arg4[%c0_8, %c0_9] : memref<1x192xf32, #tpu.memory_space<vmem>>, vector<1x192xf32>
      %22 = arith.mulf %20, %21 : vector<1x192xf32>
      %c0_10 = arith.constant 0 : index
      %c0_11 = arith.constant 0 : index
      %23 = vector.load %arg5[%c0_10, %c0_11] : memref<1x192xf32, #tpu.memory_space<vmem>>, vector<1x192xf32>
      %24 = arith.mulf %10, %22 : vector<1x192xf32>
      %25 = arith.subf %23, %24 : vector<1x192xf32>
      %c0_12 = arith.constant 0 : index
      %26 = arith.index_cast %1 : i32 to index
      %c0_13 = arith.constant 0 : index
      %27 = vector.load %arg7[%c0_12, %26, %c0_13] : memref<1x896x192xf32, #tpu.memory_space<vmem>>, vector<1x128x192xf32>
      %28 = vector.shape_cast %27 : vector<1x128x192xf32> to vector<128x192xf32>
      %29 = vector.broadcast %22 : vector<1x192xf32> to vector<128x192xf32>
      %30 = arith.mulf %28, %29 : vector<128x192xf32>
      %31 = vector.broadcast %25 : vector<1x192xf32> to vector<128x192xf32>
      %32 = arith.addf %30, %31 : vector<128x192xf32>
      %cst_14 = arith.constant 0.000000e+00 : f32
      %33 = vector.broadcast %cst_14 : f32 to vector<128x192xf32>
      %34 = arith.maximumf %32, %33 : vector<128x192xf32>
      %c0_15 = arith.constant 0 : index
      %c0_16 = arith.constant 0 : index
      %c0_17 = arith.constant 0 : index
      %35 = vector.load %arg6[%c0_15, %c0_16, %c0_17] : memref<1x128x192xf32, #tpu.memory_space<vmem>>, vector<1x128x192xf32>
      %36 = vector.shape_cast %35 : vector<1x128x192xf32> to vector<128x192xf32>
      %37 = vector.shape_cast %34 : vector<128x192xf32> to vector<1x128x192xf32>
      tpu.vector_store %arg6[%c0_15, %c0_16, %c0_17], %37 {strides = array<i32>} : memref<1x128x192xf32, #tpu.memory_space<vmem>>, vector<1x128x192xf32>,
    } else {
    }
    return
  }
  func.func @transform_0(%arg0: i32, %arg1: i32) -> (i32, i32, i32) {
    %c0_i32 = arith.constant 0 : i32
    %c0_i32_0 = arith.constant 0 : i32
    %c0_i32_1 = arith.constant 0 : i32
    %c0_i32_2 = arith.constant 0 : i32
    return %c0_i32, %c0_i32_0, %c0_i32_1 : i32, i32, i32
  }
  func.func @transform_1(%arg0: i32, %arg1: i32) -> (i32, i32, i32) {
    %c0_i32 = arith.constant 0 : i32
    %c0_i32_0 = arith.constant 0 : i32
    %c0_i32_1 = arith.constant 0 : i32
    %c0_i32_2 = arith.constant 0 : i32
    return %c0_i32, %c0_i32_0, %c0_i32_1 : i32, i32, i32
  }
  func.func @transform_2(%arg0: i32, %arg1: i32) -> (i32, i32) {
    %c0_i32 = arith.constant 0 : i32
    %c0_i32_0 = arith.constant 0 : i32
    %c0_i32_1 = arith.constant 0 : i32
    return %c0_i32, %c0_i32_0 : i32, i32
  }
  func.func @transform_3(%arg0: i32, %arg1: i32) -> (i32, i32) {
    %c0_i32 = arith.constant 0 : i32
    %c0_i32_0 = arith.constant 0 : i32
    %c0_i32_1 = arith.constant 0 : i32
    return %c0_i32, %c0_i32_0 : i32, i32
  }
  func.func @transform_4(%arg0: i32, %arg1: i32) -> (i32, i32, i32) {
    %0 = arith.muli %arg1, %arg0 : i32
    %c0_i32 = arith.constant 0 : i32
    %c0_i32_0 = arith.constant 0 : i32
    %c0_i32_1 = arith.constant 0 : i32
    return %c0_i32, %0, %c0_i32_0 : i32, i32, i32
  }
}

</mosaic_0001>

<llo_original>
// kernel: conv_bn_relu.1
$region0: #{conv_bn_relu.1}
  #allocation0 [shape = 'u32[]', space=smem, size = 0x4, offset = 0x4, fixed_abs, tag = 'smem constant byte address 0x4 - core index']
  #allocation1 [shape = 'u32[144,128]{1,0:T(1,128)}', space=vmem, size = 0x12000, scoped, tag = 'internal scratch']
  #allocation2 [shape = 'f32[1,896,192]{2,1,0:T(8,128)}', space=vmem, size = 0xe0000, scoped, tag = 'scratch operand']
  #allocation3 [shape = 'f32[1,192]{1,0:T(1,128)}', space=vmem, size = 0x400, scoped, tag = 'scratch operand']
  #allocation4 [shape = 'f32[1,192]{1,0:T(1,128)}', space=vmem, size = 0x400, scoped, tag = 'scratch operand']
  %s0 = inlined_call_operand.vmem [shape: f32[1,992,128], index: 0, kind: input, shape index: {}]
  %s1 = inlined_call_operand.vmem [shape: bf16[3,384,192], index: 1, kind: input, shape index: {}]
  %s2 = inlined_call_operand.vmem [shape: f32[1,192], index: 2, kind: input, shape index: {}]
  %s3 = inlined_call_operand.vmem [shape: f32[1,192], index: 3, kind: input, shape index: {}]
  %s4 = inlined_call_operand.vmem [shape: f32[1,896,192], index: 4, kind: output, shape index: {}]
  %s5 = sld [smem:[#allocation0]]
  $region61: #{conv_bn_relu.1} parent=0
    _
  %s7 = ssub.s32 1, %s5
  %s8 = scalar_select 0, %s7, %s5
  loop: start=0, step=1, limit=16
  $region2: #{conv_bn_relu.1} parent=0 // loop_pre_header
    _
  $region3: #{conv_bn_relu.1} parent=0 // loop_header
    %s10 = sphi 0, %s14
    %p11 = scmp.ge.s32.totalorder %s10, 16
    %s17 = sphi 0, %s29
    %s18 = sphi 0, %s25
    %s19 = sphi 0, %s17
    %s20 = sphi 0, %s18
    %s21 = sphi 0, %s19
    %s22 = sphi 0, %s20
    %s30 = sphi 0, %s30
    %s32 = sphi 0, %s30
    %s33 = sphi 0, %s32
    %s47 = sphi 0, %s33
    %s51 = sphi 0, %s51
    %s53 = sphi 0, %s51
    %s54 = sphi 0, %s53
    %s68 = sphi 0, %s54
    %s72 = sphi 0, %s72
    %s74 = sphi 0, %s72
    %s75 = sphi 0, %s74
    %s89 = sphi 0, %s75
    %s93 = sphi 0, %s93
    %s95 = sphi 0, %s93
    %s96 = sphi 0, %s95
    %s110 = sphi 0, %s96
    %s118 = sphi 0, %s120
    %s121 = sphi 0, %s118
    %s122 = sphi 0, %s121
    %s138 = sphi 0, %s122
  $region4: #{conv_bn_relu.1} parent=0 // loop_header_branch
    %13 = sbr.rel (%p11) target = $region8
  $region5: #{conv_bn_relu.1} parent=0 // loop_body
    %s15 = ssub.s32 %s10, 1
    %s16 = ssub.s32 %s10, 2
    %s23 = sadd.s32 1, %s18
    %p24 = scmp.ge.s32.totalorder %s23, 7
    %s25 = scalar_select %p24, 0, %s23
    %s26 = sadd.s32 1, %s17
    %s27 = scalar_select %p24, %s26, %s17
    %p28 = scmp.ge.s32.totalorder %s27, 2
    %s29 = scalar_select %p28, 0, %s27
    %s31 = sadd.s32 %s30, 1
    %p34 = scmp.eq.s32.totalorder %s10, 13
    %p35 = scmp.ne.s32.totalorder %s30, %s32
    %p36 = scmp.eq.s32.totalorder %s10, 0
    %p37 = por %p35, %p36
    %p38 = scmp.ne.s32.totalorder %s30, %s32
    %p39 = scmp.eq.s32.totalorder %s15, 13
    %p40 = por %p38, %p39
    %p41 = scmp.ne.s32.totalorder %s32, %s33
    %p42 = scmp.eq.s32.totalorder %s15, 0
    %p43 = por %p41, %p42
    %p44 = scmp.ne.s32.totalorder %s32, %s33
    %p45 = scmp.eq.s32.totalorder %s16, 13
    %p46 = por %p44, %p45
    %p48 = scmp.ne.s32.totalorder %s33, %s47
    %p49 = scmp.eq.s32.totalorder %s16, 0
    %p50 = por %p48, %p49
    %s52 = sadd.s32 %s51, 1
    %p55 = scmp.eq.s32.totalorder %s10, 13
    %p56 = scmp.ne.s32.totalorder %s51, %s53
    %p57 = scmp.eq.s32.totalorder %s10, 0
    %p58 = por %p56, %p57
    %p59 = scmp.ne.s32.totalorder %s51, %s53
    %p60 = scmp.eq.s32.totalorder %s15, 13
    %p61 = por %p59, %p60
    %p62 = scmp.ne.s32.totalorder %s53, %s54
    %p63 = scmp.eq.s32.totalorder %s15, 0
    %p64 = por %p62, %p63
    %p65 = scmp.ne.s32.totalorder %s53, %s54
    %p66 = scmp.eq.s32.totalorder %s16, 13
    %p67 = por %p65, %p66
    %p69 = scmp.ne.s32.totalorder %s54, %s68
    %p70 = scmp.eq.s32.totalorder %s16, 0
    %p71 = por %p69, %p70
    %s73 = sadd.s32 %s72, 1
    %p76 = scmp.eq.s32.totalorder %s10, 13
    %p77 = scmp.ne.s32.totalorder %s72, %s74
    %p78 = scmp.eq.s32.totalorder %s10, 0
    %p79 = por %p77, %p78
    %p80 = scmp.ne.s32.totalorder %s72, %s74
    %p81 = scmp.eq.s32.totalorder %s15, 13
    %p82 = por %p80, %p81
    %p83 = scmp.ne.s32.totalorder %s74, %s75
    %p84 = scmp.eq.s32.totalorder %s15, 0
    %p85 = por %p83, %p84
    %p86 = scmp.ne.s32.totalorder %s74, %s75
    %p87 = scmp.eq.s32.totalorder %s16, 13
    %p88 = por %p86, %p87
    %p90 = scmp.ne.s32.totalorder %s75, %s89
    %p91 = scmp.eq.s32.totalorder %s16, 0
    %p92 = por %p90, %p91
    %s94 = sadd.s32 %s93, 1
    %p97 = scmp.eq.s32.totalorder %s10, 13
    %p98 = scmp.ne.s32.totalorder %s93, %s95
    %p99 = scmp.eq.s32.totalorder %s10, 0
    %p100 = por %p98, %p99
    %p101 = scmp.ne.s32.totalorder %s93, %s95
    %p102 = scmp.eq.s32.totalorder %s15, 13
    %p103 = por %p101, %p102
    %p104 = scmp.ne.s32.totalorder %s95, %s96
    %p105 = scmp.eq.s32.totalorder %s15, 0
    %p106 = por %p104, %p105
    %p107 = scmp.ne.s32.totalorder %s95, %s96
    %p108 = scmp.eq.s32.totalorder %s16, 13
    %p109 = por %p107, %p108
    %p111 = scmp.ne.s32.totalorder %s96, %s110
    %p112 = scmp.eq.s32.totalorder %s16, 0
    %p113 = por %p111, %p112
    %s114 = smul.u32 %s18, %s17
    %s115 = smul.u32 %s25, %s29
    %s116 = ssub.s32 %s114, %s115
    %p117 = scmp.eq.s32.totalorder %s116, 0
    %s119 = sadd.s32 %s118, 1
    %s120 = scalar_select %p117, %s118, %s119
    %p123 = pneg %p117
    %p124 = scmp.eq.s32.totalorder %s10, 13
    %p125 = por %p123, %p124
    %p126 = scmp.ne.s32.totalorder %s118, %s121
    %p127 = scmp.eq.s32.totalorder %s10, 0
    %p128 = por %p126, %p127
    %p129 = scmp.ne.s32.totalorder %s118, %s121
    %p130 = scmp.eq.s32.totalorder %s15, 13
    %p131 = por %p129, %p130
    %p132 = scmp.ne.s32.totalorder %s121, %s122
    %p133 = scmp.eq.s32.totalorder %s15, 0
    %p134 = por %p132, %p133
    %p135 = scmp.ne.s32.totalorder %s121, %s122
    %p136 = scmp.eq.s32.totalorder %s16, 13
    %p137 = por %p135, %p136
    %p139 = scmp.ne.s32.totalorder %s122, %s138
    %p140 = scmp.eq.s32.totalorder %s16, 0
    %p141 = por %p139, %p140
    %p142 = scmp.le.s32.totalorder 1, %s10
    %p143 = scmp.lt.s32.totalorder %s10, 15
    %p144 = pnand %p142, %p143
    %p145 = pneg %p144
    // Predicated region
    $region9: #{conv_bn_relu.1} parent=5 // pred_check
      _
    $region10: #{conv_bn_relu.1} parent=5 // pred_check_branch
      %147 = sbr.rel (%p144) target = $region12
    $region11: #{conv_bn_relu.1} parent=5 // pred_region
      %s148 = ssub.s32 %s10, 1
      // Predicated region
      $region13: #{conv_bn_relu.1} parent=11 // pred_check
        %p149 = pneg %p43
      $region14: #{conv_bn_relu.1} parent=11 // pred_check_branch
        %151 = sbr.rel (%p149) target = $region16
      $region15: #{conv_bn_relu.1} parent=11 // pred_region
        _
      $region16: #{conv_bn_relu.1} parent=11 // pred_fallthru
        _
      // Predicated region
      $region17: #{conv_bn_relu.1} parent=11 // pred_check
        %p152 = pneg %p64
      $region18: #{conv_bn_relu.1} parent=11 // pred_check_branch
        %154 = sbr.rel (%p152) target = $region20
      $region19: #{conv_bn_relu.1} parent=11 // pred_region
        _
      $region20: #{conv_bn_relu.1} parent=11 // pred_fallthru
        _
      // Predicated region
      $region21: #{conv_bn_relu.1} parent=11 // pred_check
        %p155 = pneg %p85
      $region22: #{conv_bn_relu.1} parent=11 // pred_check_branch
        %157 = sbr.rel (%p155) target = $region24
      $region23: #{conv_bn_relu.1} parent=11 // pred_region
        _
      $region24: #{conv_bn_relu.1} parent=11 // pred_fallthru
        _
      // Predicated region
      $region25: #{conv_bn_relu.1} parent=11 // pred_check
        %p158 = pneg %p106
      $region26: #{conv_bn_relu.1} parent=11 // pred_check_branch
        %160 = sbr.rel (%p158) target = $region28
      $region27: #{conv_bn_relu.1} parent=11 // pred_region
        _
      $region28: #{conv_bn_relu.1} parent=11 // pred_fallthru
        _
    $region12: #{conv_bn_relu.1} parent=5 // pred_fallthru
      _
    %p161 = scmp.lt.s32.totalorder %s10, 14
    // Predicated region
    $region29: #{conv_bn_relu.1} parent=5 // pred_check
      %p162 = pneg %p161
    $region30: #{conv_bn_relu.1} parent=5 // pred_check_branch
      %164 = sbr.rel (%p162) target = $region32
    $region31: #{conv_bn_relu.1} parent=5 // pred_region
      _
    $region32: #{conv_bn_relu.1} parent=5 // pred_fallthru
      _
    %p165 = scmp.le.s32.totalorder 1, %s10
    %p166 = scmp.lt.s32.totalorder %s10, 15
    %p167 = pnand %p165, %p166
    %p168 = pneg %p167
    // Predicated region
    $region33: #{conv_bn_relu.1} parent=5 // pred_check
      _
    $region34: #{conv_bn_relu.1} parent=5 // pred_check_branch
      %170 = sbr.rel (%p167) target = $region36
    $region35: #{conv_bn_relu.1} parent=5 // pred_region
      %s171 = ssub.s32 %s10, 1
      %p172 = pneg %p43
      %p173 = pneg %p40
      %p174 = pneg %p64
      %p175 = pneg %p61
      %p176 = pneg %p85
      %p177 = pneg %p82
      %p178 = pneg %p106
      %p179 = pneg %p103
      %p180 = pneg %p134
      %p181 = pneg %p131
      %s182 = smul.u32 %s20, %s19
      %s183 = smul.u32 16, %s182
      %p184 = scmp.lt.s32.totalorder %s183, 111
      %s185 = scalar_select %p184, %s183, 111
      %s186 = smul.addr %s185, 2
      %s187 = smul.addr %s186, 8
      %s188 = scalar_lea.vmem %s4, %s187
      %s189 = smul.u32 %s20, %s19
      %s190 = smul.u32 16, %s189
      %p191 = scmp.lt.s32.totalorder %s190, 111
      %s192 = scalar_select %p191, %s190, 111
      %s193 = smul.addr %s192, 2
      %s194 = smul.addr %s193, 8
      %s195 = scalar_lea.vmem %s4, %s194
      %s196 = smul.u32 %s20, %s19
      %s197 = smul.u32 16, %s196
      %s199 = smul.u32 %s20, 128
      %p200 = scmp.eq.s32.totalorder %s19, 0
      // Predicated region
      $region37: #{conv_bn_relu.1} parent=35 // pred_check
        %p201 = pneg %p200
      $region38: #{conv_bn_relu.1} parent=35 // pred_check_branch
        %203 = sbr.rel (%p201) target = $region40
      $region39: #{conv_bn_relu.1} parent=35 // pred_region
        %p204 = scmp.eq.s32.totalorder %s20, 0
        // Predicated region
        $region41: #{conv_bn_relu.1} parent=39 // pred_check
          %p205 = pneg %p204
        $region42: #{conv_bn_relu.1} parent=39 // pred_check_branch
          %207 = sbr.rel (%p205) target = $region44
        $region43: #{conv_bn_relu.1} parent=39 // pred_region
          %v208 = vlaneseq
          %vm209 = vcmp.ge.s32.totalorder %v208, 0
          %vm210 = vcmp.lt.s32.totalorder %v208, 192
          %vm211 = vmand %vm209, %vm210
          %212 = vst.msk [vmem:[#allocation3] sm:$0x3] %vm211, 0.0
          %213 = vst.msk [vmem:[#allocation4] sm:$0x3] %vm211, 0.0
        $region44: #{conv_bn_relu.1} parent=39 // pred_fallthru
          _
        %v214 = vlaneseq
        %v215 = vshrl.u32 %v214, 7
        %v216 = vadd.s32 %v215, 8
        %v217 = vadd.s32 %v215, 16
        %v218 = vadd.s32 %v215, 24
        %v219 = vadd.s32 %v215, 32
        %v220 = vadd.s32 %v215, 40
        %v221 = vadd.s32 %v215, 48
        %v222 = vadd.s32 %v215, 56
        %v223 = vadd.s32 %v215, 64
        %v224 = vadd.s32 %v215, 72
        %v225 = vadd.s32 %v215, 80
        %v226 = vadd.s32 %v215, 88
        %v227 = vadd.s32 %v215, 96
        %v228 = vadd.s32 %v215, 104
        %v229 = vadd.s32 %v215, 112
        %v230 = vadd.s32 %v215, 120
        %v231 = vstv %s199
        %v232 = vadd.s32 %v231, %v215
        %v233 = vadd.s32 %v231, %v216
        %v234 = vadd.s32 %v231, %v217
        %v235 = vadd.s32 %v231, %v218
        %v236 = vadd.s32 %v231, %v219
        %v237 = vadd.s32 %v231, %v220
        %v238 = vadd.s32 %v231, %v221
        %v239 = vadd.s32 %v231, %v222
        %v240 = vadd.s32 %v231, %v223
        %v241 = vadd.s32 %v231, %v224
        %v242 = vadd.s32 %v231, %v225
        %v243 = vadd.s32 %v231, %v226
        %v244 = vadd.s32 %v231, %v227
        %v245 = vadd.s32 %v231, %v228
        %v246 = vadd.s32 %v231, %v229
        %v247 = vadd.s32 %v231, %v230
        %v248 = vand.u32 %v232, 31
        %v249 = vand.u32 %v233, 31
        %v250 = vand.u32 %v234, 31
        %v251 = vand.u32 %v235, 31
        %v252 = vand.u32 %v236, 31
        %v253 = vand.u32 %v237, 31
        %v254 = vand.u32 %v238, 31
        %v255 = vand.u32 %v239, 31
        %v256 = vand.u32 %v240, 31
        %v257 = vand.u32 %v241, 31
        %v258 = vand.u32 %v242, 31
        %v259 = vand.u32 %v243, 31
        %v260 = vand.u32 %v244, 31
        %v261 = vand.u32 %v245, 31
        %v262 = vand.u32 %v246, 31
        %v263 = vand.u32 %v247, 31
        %vm264 = vcmp.lt.s32.totalorder %v248, 28
        %vm265 = vcmp.lt.s32.totalorder %v249, 28
        %vm266 = vcmp.lt.s32.totalorder %v250, 28
        %vm267 = vcmp.lt.s32.totalorder %v251, 28
        %vm268 = vcmp.lt.s32.totalorder %v252, 28
        %vm269 = vcmp.lt.s32.totalorder %v253, 28
        %vm270 = vcmp.lt.s32.totalorder %v254, 28
        %vm271 = vcmp.lt.s32.totalorder %v255, 28
        %vm272 = vcmp.lt.s32.totalorder %v256, 28
        %vm273 = vcmp.lt.s32.totalorder %v257, 28
        %vm274 = vcmp.lt.s32.totalorder %v258, 28
        %vm275 = vcmp.lt.s32.totalorder %v259, 28
        %vm276 = vcmp.lt.s32.totalorder %v260, 28
        %vm277 = vcmp.lt.s32.totalorder %v261, 28
        %vm278 = vcmp.lt.s32.totalorder %v262, 28
        %vm279 = vcmp.lt.s32.totalorder %v263, 28
        %s280 = scalar_lea.vmem %s0, %s199
        %v281 = vld [vmem:[%s280] sm:$0xff]
        %v282 = vld [vmem:[%s280 + $0x8] sm:$0xff]
        %v283 = vld [vmem:[%s280 + $0x10] sm:$0xff]
        %v284 = vld [vmem:[%s280 + $0x18] sm:$0xff]
        %v285 = vld [vmem:[%s280 + $0x20] sm:$0xff]
        %v286 = vld [vmem:[%s280 + $0x28] sm:$0xff]
        %v287 = vld [vmem:[%s280 + $0x30] sm:$0xff]
        %v288 = vld [vmem:[%s280 + $0x38] sm:$0xff]
        %v289 = vld [vmem:[%s280 + $0x40] sm:$0xff]
        %v290 = vld [vmem:[%s280 + $0x48] sm:$0xff]
        %v291 = vld [vmem:[%s280 + $0x50] sm:$0xff]
        %v292 = vld [vmem:[%s280 + $0x58] sm:$0xff]
        %v293 = vld [vmem:[%s280 + $0x60] sm:$0xff]
        %v294 = vld [vmem:[%s280 + $0x68] sm:$0xff]
        %v295 = vld [vmem:[%s280 + $0x70] sm:$0xff]
        %v296 = vld [vmem:[%s280 + $0x78] sm:$0xff]
        %v297 = vld [vmem:[%s280 + $0x80] sm:$0xff]
        %v298 = vpack.c.bf16 %v282, %v281
        %v299 = vpack.c.bf16 %v284, %v283
        %v300 = vpack.c.bf16 %v286, %v285
        %v301 = vpack.c.bf16 %v288, %v287
        %v302 = vpack.c.bf16 %v290, %v289
        %v303 = vpack.c.bf16 %v292, %v291
        %v304 = vpack.c.bf16 %v294, %v293
        %v305 = vpack.c.bf16 %v296, %v295
        %v306 = vpack.c.bf16 %v297, %v297
        %vm307 = vsmask.f32 7424
        %v309 = vshrl.u32 %v298, 16
        %v311 = vshll.u32 %v298, 16
        %v313 = vrot.slane %v311, 1
        %v314 = vor.u32 %v309, %v313
        %v316 = vshll.u32 %v299, 16
        %v318 = vrot.slane %v316, 1
        %v319 = vsel %vm307, %v314, %v318
        %v320 = vshrl.u32 %v299, 16
        %v322 = vor.u32 %v320, %v318
        %v324 = vshll.u32 %v300, 16
        %v326 = vrot.slane %v324, 1
        %v327 = vsel %vm307, %v322, %v326
        %v328 = vshrl.u32 %v300, 16
        %v330 = vor.u32 %v328, %v326
        %v332 = vshll.u32 %v301, 16
        %v334 = vrot.slane %v332, 1
        %v335 = vsel %vm307, %v330, %v334
        %v336 = vshrl.u32 %v301, 16
        %v338 = vor.u32 %v336, %v334
        %v340 = vshll.u32 %v302, 16
        %v342 = vrot.slane %v340, 1
        %v343 = vsel %vm307, %v338, %v342
        %v344 = vshrl.u32 %v302, 16
        %v346 = vor.u32 %v344, %v342
        %v348 = vshll.u32 %v303, 16
        %v350 = vrot.slane %v348, 1
        %v351 = vsel %vm307, %v346, %v350
        %v352 = vshrl.u32 %v303, 16
        %v354 = vor.u32 %v352, %v350
        %v356 = vshll.u32 %v304, 16
        %v358 = vrot.slane %v356, 1
        %v359 = vsel %vm307, %v354, %v358
        %v360 = vshrl.u32 %v304, 16
        %v362 = vor.u32 %v360, %v358
        %v364 = vshll.u32 %v305, 16
        %v366 = vrot.slane %v364, 1
        %v367 = vsel %vm307, %v362, %v366
        %v368 = vshrl.u32 %v305, 16
        %v370 = vor.u32 %v368, %v366
        %v372 = vshll.u32 %v306, 16
        %v374 = vrot.slane %v372, 1
        %v375 = vsel %vm307, %v370, %v374
        %vm393 = vcmask 1046528
        %v394 = vrot.slane %v298, 1
        %v395 = vrot.slane %v299, 1
        %v396 = vsel %vm393, %v394, %v395
        %v397 = vrot.slane %v300, 1
        %v398 = vsel %vm393, %v395, %v397
        %v399 = vrot.slane %v301, 1
        %v400 = vsel %vm393, %v397, %v399
        %v401 = vrot.slane %v302, 1
        %v402 = vsel %vm393, %v399, %v401
        %v403 = vrot.slane %v303, 1
        %v404 = vsel %vm393, %v401, %v403
        %v405 = vrot.slane %v304, 1
        %v406 = vsel %vm393, %v403, %v405
        %v407 = vrot.slane %v305, 1
        %v408 = vsel %vm393, %v405, %v407
        %v409 = vrot.slane %v306, 1
        %v410 = vsel %vm393, %v407, %v409
        %v419 = vld [vmem:[%s1] sm:$0xff]
        %v420 = vld [vmem:[%s1 + $0x8] sm:$0xff]
        %v421 = vld [vmem:[%s1 + $0x10] sm:$0xff]
        %v422 = vld [vmem:[%s1 + $0x18] sm:$0xff]
        %v423 = vld [vmem:[%s1 + $0x20] sm:$0xff]
        %v424 = vld [vmem:[%s1 + $0x28] sm:$0xff]
        %v425 = vld [vmem:[%s1 + $0x30] sm:$0xff]
        %v426 = vld [vmem:[%s1 + $0x38] sm:$0xff]
        %v427 = vld [vmem:[%s1 + $0x40] sm:$0xff]
        %v428 = vld [vmem:[%s1 + $0x48] sm:$0xff]
        %v429 = vld [vmem:[%s1 + $0x50] sm:$0xff]
        %v430 = vld [vmem:[%s1 + $0x58] sm:$0xff]
        %v431 = vld [vmem:[%s1 + $0x60] sm:$0xff]
        %v432 = vld [vmem:[%s1 + $0x68] sm:$0xff]
        %v433 = vld [vmem:[%s1 + $0x70] sm:$0xff]
        %v434 = vld [vmem:[%s1 + $0x78] sm:$0xff]
        %v435 = vld [vmem:[%s1 + $0x80] sm:$0xff]
        %v436 = vld [vmem:[%s1 + $0x88] sm:$0xff]
        %v437 = vld [vmem:[%s1 + $0x90] sm:$0xff]
        %v438 = vld [vmem:[%s1 + $0x98] sm:$0xff]
        %v439 = vld [vmem:[%s1 + $0xa0] sm:$0xff]
        %v440 = vld [vmem:[%s1 + $0xa8] sm:$0xff]
        %v441 = vld [vmem:[%s1 + $0xb0] sm:$0xff]
        %v442 = vld [vmem:[%s1 + $0xb8] sm:$0xff]
        %v443 = vld [vmem:[%s1 + $0xc0] sm:$0xff]
        %v444 = vld [vmem:[%s1 + $0xc8] sm:$0xff]
        %v445 = vld [vmem:[%s1 + $0xd0] sm:$0xff]
        %v446 = vld [vmem:[%s1 + $0xd8] sm:$0xff]
        %v447 = vld [vmem:[%s1 + $0xe0] sm:$0xff]
        %v448 = vld [vmem:[%s1 + $0xe8] sm:$0xff]
        %v449 = vld [vmem:[%s1 + $0xf0] sm:$0xff]
        %v450 = vld [vmem:[%s1 + $0xf8] sm:$0xff]
        %v451 = vld [vmem:[%s1 + $0x100] sm:$0xff]
        %v452 = vld [vmem:[%s1 + $0x108] sm:$0xff]
        %v453 = vld [vmem:[%s1 + $0x110] sm:$0xff]
        %v454 = vld [vmem:[%s1 + $0x118] sm:$0xff]
        %v455 = vld [vmem:[%s1 + $0x120] sm:$0xff]
        %v456 = vld [vmem:[%s1 + $0x128] sm:$0xff]
        %v457 = vld [vmem:[%s1 + $0x130] sm:$0xff]
        %v458 = vld [vmem:[%s1 + $0x138] sm:$0xff]
        %v459 = vld [vmem:[%s1 + $0x140] sm:$0xff]
        %v460 = vld [vmem:[%s1 + $0x148] sm:$0xff]
        %v461 = vld [vmem:[%s1 + $0x150] sm:$0xff]
        %v462 = vld [vmem:[%s1 + $0x158] sm:$0xff]
        %v463 = vld [vmem:[%s1 + $0x160] sm:$0xff]
        %v464 = vld [vmem:[%s1 + $0x168] sm:$0xff]
        %v465 = vld [vmem:[%s1 + $0x170] sm:$0xff]
        %v466 = vld [vmem:[%s1 + $0x178] sm:$0xff]
        %s467 = sadd.s32 %s199, 32
        %s468 = scalar_lea.vmem %s0, %s467
        %v469 = vld [vmem:[%s468] sm:$0xff]
        %v470 = vld [vmem:[%s468 + $0x8] sm:$0xff]
        %v471 = vld [vmem:[%s468 + $0x10] sm:$0xff]
        %v472 = vld [vmem:[%s468 + $0x18] sm:$0xff]
        %v473 = vld [vmem:[%s468 + $0x20] sm:$0xff]
        %v474 = vld [vmem:[%s468 + $0x28] sm:$0xff]
        %v475 = vld [vmem:[%s468 + $0x30] sm:$0xff]
        %v476 = vld [vmem:[%s468 + $0x38] sm:$0xff]
        %v477 = vld [vmem:[%s468 + $0x40] sm:$0xff]
        %v478 = vld [vmem:[%s468 + $0x48] sm:$0xff]
        %v479 = vld [vmem:[%s468 + $0x50] sm:$0xff]
        %v480 = vld [vmem:[%s468 + $0x58] sm:$0xff]
        %v481 = vld [vmem:[%s468 + $0x60] sm:$0xff]
        %v482 = vld [vmem:[%s468 + $0x68] sm:$0xff]
        %v483 = vld [vmem:[%s468 + $0x70] sm:$0xff]
        %v484 = vld [vmem:[%s468 + $0x78] sm:$0xff]
        %v485 = vld [vmem:[%s468 + $0x80] sm:$0xff]
        %v486 = vpack.c.bf16 %v470, %v469
        %v487 = vpack.c.bf16 %v472, %v471
        %v488 = vpack.c.bf16 %v474, %v473
        %v489 = vpack.c.bf16 %v476, %v475
        %v490 = vpack.c.bf16 %v478, %v477
        %v491 = vpack.c.bf16 %v480, %v479
        %v492 = vpack.c.bf16 %v482, %v481
        %v493 = vpack.c.bf16 %v484, %v483
        %v494 = vpack.c.bf16 %v485, %v485
        %v496 = vshrl.u32 %v486, 16
        %v498 = vshll.u32 %v486, 16
        %v500 = vrot.slane %v498, 1
        %v501 = vor.u32 %v496, %v500
        %v503 = vshll.u32 %v487, 16
        %v505 = vrot.slane %v503, 1
        %v506 = vsel %vm307, %v501, %v505
        %v507 = vshrl.u32 %v487, 16
        %v509 = vor.u32 %v507, %v505
        %v511 = vshll.u32 %v488, 16
        %v513 = vrot.slane %v511, 1
        %v514 = vsel %vm307, %v509, %v513
        %v515 = vshrl.u32 %v488, 16
        %v517 = vor.u32 %v515, %v513
        %v519 = vshll.u32 %v489, 16
        %v521 = vrot.slane %v519, 1
        %v522 = vsel %vm307, %v517, %v521
        %v523 = vshrl.u32 %v489, 16
        %v525 = vor.u32 %v523, %v521
        %v527 = vshll.u32 %v490, 16
        %v529 = vrot.slane %v527, 1
        %v530 = vsel %vm307, %v525, %v529
        %v531 = vshrl.u32 %v490, 16
        %v533 = vor.u32 %v531, %v529
        %v535 = vshll.u32 %v491, 16
        %v537 = vrot.slane %v535, 1
        %v538 = vsel %vm307, %v533, %v537
        %v539 = vshrl.u32 %v491, 16
        %v541 = vor.u32 %v539, %v537
        %v543 = vshll.u32 %v492, 16
        %v545 = vrot.slane %v543, 1
        %v546 = vsel %vm307, %v541, %v545
        %v547 = vshrl.u32 %v492, 16
        %v549 = vor.u32 %v547, %v545
        %v551 = vshll.u32 %v493, 16
        %v553 = vrot.slane %v551, 1
        %v554 = vsel %vm307, %v549, %v553
        %v555 = vshrl.u32 %v493, 16
        %v557 = vor.u32 %v555, %v553
        %v559 = vshll.u32 %v494, 16
        %v561 = vrot.slane %v559, 1
        %v562 = vsel %vm307, %v557, %v561
        %v580 = vrot.slane %v486, 1
        %v581 = vrot.slane %v487, 1
        %v582 = vsel %vm393, %v580, %v581
        %v583 = vrot.slane %v488, 1
        %v584 = vsel %vm393, %v581, %v583
        %v585 = vrot.slane %v489, 1
        %v586 = vsel %vm393, %v583, %v585
        %v587 = vrot.slane %v490, 1
        %v588 = vsel %vm393, %v585, %v587
        %v589 = vrot.slane %v491, 1
        %v590 = vsel %vm393, %v587, %v589
        %v591 = vrot.slane %v492, 1
        %v592 = vsel %vm393, %v589, %v591
        %v593 = vrot.slane %v493, 1
        %v594 = vsel %vm393, %v591, %v593
        %v595 = vrot.slane %v494, 1
        %v596 = vsel %vm393, %v593, %v595
        %s605 = scalar_lea.vmem %s1, 384
        %v606 = vld [vmem:[%s605] sm:$0xff]
        %v607 = vld [vmem:[%s605 + $0x8] sm:$0xff]
        %v608 = vld [vmem:[%s605 + $0x10] sm:$0xff]
        %v609 = vld [vmem:[%s605 + $0x18] sm:$0xff]
        %v610 = vld [vmem:[%s605 + $0x20] sm:$0xff]
        %v611 = vld [vmem:[%s605 + $0x28] sm:$0xff]
        %v612 = vld [vmem:[%s605 + $0x30] sm:$0xff]
        %v613 = vld [vmem:[%s605 + $0x38] sm:$0xff]
        %v614 = vld [vmem:[%s605 + $0x40] sm:$0xff]
        %v615 = vld [vmem:[%s605 + $0x48] sm:$0xff]
        %v616 = vld [vmem:[%s605 + $0x50] sm:$0xff]
        %v617 = vld [vmem:[%s605 + $0x58] sm:$0xff]
        %v618 = vld [vmem:[%s605 + $0x60] sm:$0xff]
        %v619 = vld [vmem:[%s605 + $0x68] sm:$0xff]
        %v620 = vld [vmem:[%s605 + $0x70] sm:$0xff]
        %v621 = vld [vmem:[%s605 + $0x78] sm:$0xff]
        %v622 = vld [vmem:[%s605 + $0x80] sm:$0xff]
        %v623 = vld [vmem:[%s605 + $0x88] sm:$0xff]
        %v624 = vld [vmem:[%s605 + $0x90] sm:$0xff]
        %v625 = vld [vmem:[%s605 + $0x98] sm:$0xff]
        %v626 = vld [vmem:[%s605 + $0xa0] sm:$0xff]
        %v627 = vld [vmem:[%s605 + $0xa8] sm:$0xff]
        %v628 = vld [vmem:[%s605 + $0xb0] sm:$0xff]
        %v629 = vld [vmem:[%s605 + $0xb8] sm:$0xff]
        %v630 = vld [vmem:[%s605 + $0xc0] sm:$0xff]
        %v631 = vld [vmem:[%s605 + $0xc8] sm:$0xff]
        %v632 = vld [vmem:[%s605 + $0xd0] sm:$0xff]
        %v633 = vld [vmem:[%s605 + $0xd8] sm:$0xff]
        %v634 = vld [vmem:[%s605 + $0xe0] sm:$0xff]
        %v635 = vld [vmem:[%s605 + $0xe8] sm:$0xff]
        %v636 = vld [vmem:[%s605 + $0xf0] sm:$0xff]
        %v637 = vld [vmem:[%s605 + $0xf8] sm:$0xff]
        %v638 = vld [vmem:[%s605 + $0x100] sm:$0xff]
        %v639 = vld [vmem:[%s605 + $0x108] sm:$0xff]
        %v640 = vld [vmem:[%s605 + $0x110] sm:$0xff]
        %v641 = vld [vmem:[%s605 + $0x118] sm:$0xff]
        %v642 = vld [vmem:[%s605 + $0x120] sm:$0xff]
        %v643 = vld [vmem:[%s605 + $0x128] sm:$0xff]
        %v644 = vld [vmem:[%s605 + $0x130] sm:$0xff]
        %v645 = vld [vmem:[%s605 + $0x138] sm:$0xff]
        %v646 = vld [vmem:[%s605 + $0x140] sm:$0xff]
        %v647 = vld [vmem:[%s605 + $0x148] sm:$0xff]
        %v648 = vld [vmem:[%s605 + $0x150] sm:$0xff]
        %v649 = vld [vmem:[%s605 + $0x158] sm:$0xff]
        %v650 = vld [vmem:[%s605 + $0x160] sm:$0xff]
        %v651 = vld [vmem:[%s605 + $0x168] sm:$0xff]
        %v652 = vld [vmem:[%s605 + $0x170] sm:$0xff]
        %v653 = vld [vmem:[%s605 + $0x178] sm:$0xff]
        %v702 = vunpack.c.l.b16 %v606
        %v703 = vunpack.c.h.b16 %v606
        %v704 = vunpack.c.l.b16 %v607
        %v705 = vunpack.c.h.b16 %v607
        %v706 = vunpack.c.l.b16 %v608
        %v707 = vunpack.c.h.b16 %v608
        %v708 = vunpack.c.l.b16 %v609
        %v709 = vunpack.c.h.b16 %v609
        %v710 = vunpack.c.l.b16 %v610
        %v711 = vunpack.c.h.b16 %v610
        %v712 = vunpack.c.l.b16 %v611
        %v713 = vunpack.c.h.b16 %v611
        %v714 = vunpack.c.l.b16 %v612
        %v715 = vunpack.c.h.b16 %v612
        %v716 = vunpack.c.l.b16 %v613
        %v717 = vunpack.c.h.b16 %v613
        %v718 = vunpack.c.l.b16 %v614
        %v719 = vunpack.c.h.b16 %v614
        %v720 = vunpack.c.l.b16 %v615
        %v721 = vunpack.c.h.b16 %v615
        %v722 = vunpack.c.l.b16 %v616
        %v723 = vunpack.c.h.b16 %v616
        %v724 = vunpack.c.l.b16 %v617
        %v725 = vunpack.c.h.b16 %v617
        %v726 = vunpack.c.l.b16 %v618
        %v727 = vunpack.c.h.b16 %v618
        %v728 = vunpack.c.l.b16 %v619
        %v729 = vunpack.c.h.b16 %v619
        %v730 = vunpack.c.l.b16 %v620
        %v731 = vunpack.c.h.b16 %v620
        %v732 = vunpack.c.l.b16 %v621
        %v733 = vunpack.c.h.b16 %v621
        %v734 = vunpack.c.l.b16 %v622
        %v735 = vunpack.c.h.b16 %v622
        %v736 = vunpack.c.l.b16 %v623
        %v737 = vunpack.c.h.b16 %v623
        %v738 = vunpack.c.l.b16 %v624
        %v739 = vunpack.c.h.b16 %v624
        %v740 = vunpack.c.l.b16 %v625
        %v741 = vunpack.c.h.b16 %v625
        %v742 = vunpack.c.l.b16 %v626
        %v743 = vunpack.c.h.b16 %v626
        %v744 = vunpack.c.l.b16 %v627
        %v745 = vunpack.c.h.b16 %v627
        %v746 = vunpack.c.l.b16 %v628
        %v747 = vunpack.c.h.b16 %v628
        %v748 = vunpack.c.l.b16 %v629
        %v749 = vunpack.c.h.b16 %v629
        %v750 = vunpack.c.l.b16 %v630
        %v751 = vunpack.c.h.b16 %v630
        %v752 = vunpack.c.l.b16 %v631
        %v753 = vunpack.c.h.b16 %v631
        %v754 = vunpack.c.l.b16 %v632
        %v755 = vunpack.c.h.b16 %v632
        %v756 = vunpack.c.l.b16 %v633
        %v757 = vunpack.c.h.b16 %v633
        %v758 = vunpack.c.l.b16 %v634
        %v759 = vunpack.c.h.b16 %v634
        %v760 = vunpack.c.l.b16 %v635
        %v761 = vunpack.c.h.b16 %v635
        %v762 = vunpack.c.l.b16 %v636
        %v763 = vunpack.c.h.b16 %v636
        %v764 = vunpack.c.l.b16 %v637
        %v765 = vunpack.c.h.b16 %v637
        %v766 = vunpack.c.l.b16 %v638
        %v767 = vunpack.c.h.b16 %v638
        %v768 = vunpack.c.l.b16 %v639
        %v769 = vunpack.c.h.b16 %v639
        %v770 = vunpack.c.l.b16 %v640
        %v771 = vunpack.c.h.b16 %v640
        %v772 = vunpack.c.l.b16 %v641
        %v773 = vunpack.c.h.b16 %v641
        %v774 = vunpack.c.l.b16 %v642
        %v775 = vunpack.c.h.b16 %v642
        %v776 = vunpack.c.l.b16 %v643
        %v777 = vunpack.c.h.b16 %v643
        %v778 = vunpack.c.l.b16 %v644
        %v779 = vunpack.c.h.b16 %v644
        %v780 = vunpack.c.l.b16 %v645
        %v781 = vunpack.c.h.b16 %v645
        %v782 = vunpack.c.l.b16 %v646
        %v783 = vunpack.c.h.b16 %v646
        %v784 = vunpack.c.l.b16 %v647
        %v785 = vunpack.c.h.b16 %v647
        %v786 = vunpack.c.l.b16 %v648
        %v787 = vunpack.c.h.b16 %v648
        %v788 = vunpack.c.l.b16 %v649
        %v789 = vunpack.c.h.b16 %v649
        %v790 = vunpack.c.l.b16 %v650
        %v791 = vunpack.c.h.b16 %v650
        %v792 = vunpack.c.l.b16 %v651
        %v793 = vunpack.c.h.b16 %v651
        %v794 = vunpack.c.l.b16 %v652
        %v795 = vunpack.c.h.b16 %v652
        %v796 = vunpack.c.l.b16 %v653
        %v797 = vunpack.c.h.b16 %v653
        %v798 = vpack.c.b16 %v704, %v702
        %v799 = vpack.c.b16 %v705, %v703
        %v800 = vpack.c.b16 %v708, %v706
        %v801 = vpack.c.b16 %v709, %v707
        %v802 = vpack.c.b16 %v712, %v710
        %v803 = vpack.c.b16 %v713, %v711
        %v804 = vpack.c.b16 %v716, %v714
        %v805 = vpack.c.b16 %v717, %v715
        %v806 = vpack.c.b16 %v720, %v718
        %v807 = vpack.c.b16 %v721, %v719
        %v808 = vpack.c.b16 %v724, %v722
        %v809 = vpack.c.b16 %v725, %v723
        %v810 = vpack.c.b16 %v728, %v726
        %v811 = vpack.c.b16 %v729, %v727
        %v812 = vpack.c.b16 %v732, %v730
        %v813 = vpack.c.b16 %v733, %v731
        %v814 = vpack.c.b16 %v736, %v734
        %v815 = vpack.c.b16 %v737, %v735
        %v816 = vpack.c.b16 %v740, %v738
        %v817 = vpack.c.b16 %v741, %v739
        %v818 = vpack.c.b16 %v744, %v742
        %v819 = vpack.c.b16 %v745, %v743
        %v820 = vpack.c.b16 %v748, %v746
        %v821 = vpack.c.b16 %v749, %v747
        %v822 = vpack.c.b16 %v752, %v750
        %v823 = vpack.c.b16 %v753, %v751
        %v824 = vpack.c.b16 %v756, %v754
        %v825 = vpack.c.b16 %v757, %v755
        %v826 = vpack.c.b16 %v760, %v758
        %v827 = vpack.c.b16 %v761, %v759
        %v828 = vpack.c.b16 %v764, %v762
        %v829 = vpack.c.b16 %v765, %v763
        %v830 = vpack.c.b16 %v768, %v766
        %v831 = vpack.c.b16 %v769, %v767
        %v832 = vpack.c.b16 %v772, %v770
        %v833 = vpack.c.b16 %v773, %v771
        %v834 = vpack.c.b16 %v776, %v774
        %v835 = vpack.c.b16 %v777, %v775
        %v836 = vpack.c.b16 %v780, %v778
        %v837 = vpack.c.b16 %v781, %v779
        %v838 = vpack.c.b16 %v784, %v782
        %v839 = vpack.c.b16 %v785, %v783
        %v840 = vpack.c.b16 %v788, %v786
        %v841 = vpack.c.b16 %v789, %v787
        %v842 = vpack.c.b16 %v792, %v790
        %v843 = vpack.c.b16 %v793, %v791
        %v844 = vpack.c.b16 %v796, %v794
        %v845 = vpack.c.b16 %v797, %v795
        %894 = vmatprep.subr.bf16.mxu0 %v799
        %895 = vmatpush1.bf16.msra.mxu0 %v798
        %896 = vmatprep.subr.bf16.mxu0 %v801
        %897 = vmatpush1.bf16.msra.mxu0 %v800
        %898 = vmatprep.subr.bf16.mxu0 %v803
        %899 = vmatpush1.bf16.msra.mxu0 %v802
        %900 = vmatprep.subr.bf16.mxu0 %v805
        %901 = vmatpush1.bf16.msra.mxu0 %v804
        %902 = vmatprep.subr.bf16.mxu0 %v807
        %903 = vmatpush1.bf16.msra.mxu0 %v806
        %904 = vmatprep.subr.bf16.mxu0 %v809
        %905 = vmatpush1.bf16.msra.mxu0 %v808
        %906 = vmatprep.subr.bf16.mxu0 %v811
        %907 = vmatpush1.bf16.msra.mxu0 %v810
        %908 = vmatprep.subr.bf16.mxu0 %v813
        %909 = vmatpush1.bf16.msra.mxu0 %v812
        %910 = vmatprep.subr.bf16.mxu0 %v815
        %911 = vmatpush1.bf16.msra.mxu0 %v814
        %912 = vmatprep.subr.bf16.mxu0 %v817
        %913 = vmatpush1.bf16.msra.mxu0 %v816
        %914 = vmatprep.subr.bf16.mxu0 %v819
        %915 = vmatpush1.bf16.msra.mxu0 %v818
        %916 = vmatprep.subr.bf16.mxu0 %v821
        %917 = vmatpush1.bf16.msra.mxu0 %v820
        %918 = vmatprep.subr.bf16.mxu0 %v823
        %919 = vmatpush1.bf16.msra.mxu0 %v822
        %920 = vmatprep.subr.bf16.mxu0 %v825
        %921 = vmatpush1.bf16.msra.mxu0 %v824
        %922 = vmatprep.subr.bf16.mxu0 %v827
        %923 = vmatpush1.bf16.msra.mxu0 %v826
        %924 = vmatprep.subr.bf16.mxu0 %v829
        %925 = vmatpush1.bf16.msra.mxu0 %v828
        %926 = vmatprep.mubr.bf16.mxu0 %v506
        %927 = vmatmul.mubr.bf16.gmra.mrb[0].mxu0 %v486
        %v928 = vpop.f32.mrb[0].mxu0
        %v929 = vadd.f32 0.0, %v928
        %v930 = vpop.f32.mrb[0].mxu0
        %v931 = vadd.f32 0.0, %v930
        %v932 = vpop.f32.mrb[0].mxu0
        %v933 = vadd.f32 0.0, %v932
        %v934 = vpop.f32.mrb[0].mxu0
        %v935 = vadd.f32 0.0, %v934
        %936 = vmatprep.mubr.bf16.mxu0 %v514
        %937 = vmatmul.mubr.bf16.gmra.mrb[0].mxu0 %v487
        %v938 = vpop.f32.mrb[0].mxu0
        %v939 = vadd.f32 0.0, %v938
        %v940 = vpop.f32.mrb[0].mxu0
        %v941 = vadd.f32 0.0, %v940
        %v942 = vpop.f32.mrb[0].mxu0
        %v943 = vadd.f32 0.0, %v942
        %v944 = vpop.f32.mrb[0].mxu0
        %v945 = vadd.f32 0.0, %v944
        %946 = vmatprep.mubr.bf16.mxu0 %v522
        %947 = vmatmul.mubr.bf16.gmra.mrb[0].mxu0 %v488
        %v948 = vpop.f32.mrb[0].mxu0
        %v949 = vadd.f32 0.0, %v948
        %v950 = vpop.f32.mrb[0].mxu0
        %v951 = vadd.f32 0.0, %v950
        %v952 = vpop.f32.mrb[0].mxu0
        %v953 = vadd.f32 0.0, %v952
        %v954 = vpop.f32.mrb[0].mxu0
        %v955 = vadd.f32 0.0, %v954
        %956 = vmatprep.mubr.bf16.mxu0 %v530
        %957 = vmatmul.mubr.bf16.gmra.mrb[0].mxu0 %v489
        %v958 = vpop.f32.mrb[0].mxu0
        %v959 = vadd.f32 0.0, %v958
        %v960 = vpop.f32.mrb[0].mxu0
        %v961 = vadd.f32 0.0, %v960
        %v962 = vpop.f32.mrb[0].mxu0
        %v963 = vadd.f32 0.0, %v962
        %v964 = vpop.f32.mrb[0].mxu0
        %v965 = vadd.f32 0.0, %v964
        %966 = vmatprep.mubr.bf16.mxu0 %v538
        %967 = vmatmul.mubr.bf16.gmra.mrb[0].mxu0 %v490
        %v968 = vpop.f32.mrb[0].mxu0
        %v969 = vadd.f32 0.0, %v968
        %v970 = vpop.f32.mrb[0].mxu0
        %v971 = vadd.f32 0.0, %v970
        %v972 = vpop.f32.mrb[0].mxu0
        %v973 = vadd.f32 0.0, %v972
        %v974 = vpop.f32.mrb[0].mxu0
        %v975 = vadd.f32 0.0, %v974
        %976 = vmatprep.mubr.bf16.mxu0 %v546
        %977 = vmatmul.mubr.bf16.gmra.mrb[0].mxu0 %v491
        %v978 = vpop.f32.mrb[0].mxu0
        %v979 = vadd.f32 0.0, %v978
        %v980 = vpop.f32.mrb[0].mxu0
        %v981 = vadd.f32 0.0, %v980
        %v982 = vpop.f32.mrb[0].mxu0
        %v983 = vadd.f32 0.0, %v982
        %v984 = vpop.f32.mrb[0].mxu0
        %v985 = vadd.f32 0.0, %v984
        %986 = vmatprep.mubr.bf16.mxu0 %v554
        %987 = vmatmul.mubr.bf16.gmra.mrb[0].mxu0 %v492
        %v988 = vpop.f32.mrb[0].mxu0
        %v989 = vadd.f32 0.0, %v988
        %v990 = vpop.f32.mrb[0].mxu0
        %v991 = vadd.f32 0.0, %v990
        %v992 = vpop.f32.mrb[0].mxu0
        %v993 = vadd.f32 0.0, %v992
        %v994 = vpop.f32.mrb[0].mxu0
        %v995 = vadd.f32 0.0, %v994
        %996 = vmatprep.mubr.bf16.mxu0 %v562
        %997 = vmatmul.mubr.bf16.gmra.mrb[0].mxu0 %v493
        %v998 = vpop.f32.mrb[0].mxu0
        %v999 = vadd.f32 0.0, %v998
        %v1000 = vpop.f32.mrb[0].mxu0
        %v1001 = vadd.f32 0.0, %v1000
        %v1002 = vpop.f32.mrb[0].mxu0
        %v1003 = vadd.f32 0.0, %v1002
        %v1004 = vpop.f32.mrb[0].mxu0
        %v1005 = vadd.f32 0.0, %v1004
        %1006 = vdwg.mxu0
        %1007 = vmatprep.subr.bf16.mxu0 %v831
        %1008 = vmatpush1.bf16.msra.mxu0 %v830
        %1009 = vmatprep.subr.bf16.mxu0 %v833
        %1010 = vmatpush1.bf16.msra.mxu0 %v832
        %1011 = vmatprep.subr.bf16.mxu0 %v835
        %1012 = vmatpush1.bf16.msra.mxu0 %v834
        %1013 = vmatprep.subr.bf16.mxu0 %v837
        %1014 = vmatpush1.bf16.msra.mxu0 %v836
        %1015 = vmatprep.subr.bf16.mxu0 %v839
        %1016 = vmatpush1.bf16.msra.mxu0 %v838
        %1017 = vmatprep.subr.bf16.mxu0 %v841
        %1018 = vmatpush1.bf16.msra.mxu0 %v840
        %1019 = vmatprep.subr.bf16.mxu0 %v843
        %1020 = vmatpush1.bf16.msra.mxu0 %v842
        %1021 = vmatprep.subr.bf16.mxu0 %v845
        %1022 = vmatpush1.bf16.msra.mxu0 %v844
        %1023 = vmatprep.subr.bf16.mxu0 0
        %1024 = vmatpush1.bf16.msra.mxu0 0
        %1025 = vmatprep.subr.bf16.mxu0 0
        %1026 = vmatpush1.bf16.msra.mxu0 0
        %1027 = vmatprep.subr.bf16.mxu0 0
        %1028 = vmatpush1.bf16.msra.mxu0 0
        %1029 = vmatprep.subr.bf16.mxu0 0
        %1030 = vmatpush1.bf16.msra.mxu0 0
        %1031 = vmatprep.subr.bf16.mxu0 0
        %1032 = vmatpush1.bf16.msra.mxu0 0
        %1033 = vmatprep.subr.bf16.mxu0 0
        %1034 = vmatpush1.bf16.msra.mxu0 0
        %1035 = vmatprep.subr.bf16.mxu0 0
        %1036 = vmatpush1.bf16.msra.mxu0 0
        %1037 = vmatprep.subr.bf16.mxu0 0
        %1038 = vmatpush1.bf16.msra.mxu0 0
        %1039 = vmatprep.mubr.bf16.mxu0 0
        %1040 = vmatmul.mubr.bf16.gmra.mrb[0].mxu0 %v582
        %v1041 = vpop.f32.mrb[0].mxu0
        %v1042 = vadd.f32 %v929, %v1041
        %v1043 = vpop.f32.mrb[0].mxu0
        %v1044 = vadd.f32 %v931, %v1043
        %v1045 = vpop.f32.mrb[0].mxu0
        %v1046 = vadd.f32 %v933, %v1045
        %v1047 = vpop.f32.mrb[0].mxu0
        %v1048 = vadd.f32 %v935, %v1047
        %1049 = vmatprep.mubr.bf16.mxu0 0
        %1050 = vmatmul.mubr.bf16.gmra.mrb[0].mxu0 %v584
        %v1051 = vpop.f32.mrb[0].mxu0
        %v1052 = vadd.f32 %v939, %v1051
        %v1053 = vpop.f32.mrb[0].mxu0
        %v1054 = vadd.f32 %v941, %v1053
        %v1055 = vpop.f32.mrb[0].mxu0
        %v1056 = vadd.f32 %v943, %v1055
        %v1057 = vpop.f32.mrb[0].mxu0
        %v1058 = vadd.f32 %v945, %v1057
        %1059 = vmatprep.mubr.bf16.mxu0 0
        %1060 = vmatmul.mubr.bf16.gmra.mrb[0].mxu0 %v586
        %v1061 = vpop.f32.mrb[0].mxu0
        %v1062 = vadd.f32 %v949, %v1061
        %v1063 = vpop.f32.mrb[0].mxu0
        %v1064 = vadd.f32 %v951, %v1063
        %v1065 = vpop.f32.mrb[0].mxu0
        %v1066 = vadd.f32 %v953, %v1065
        %v1067 = vpop.f32.mrb[0].mxu0
        %v1068 = vadd.f32 %v955, %v1067
        %1069 = vmatprep.mubr.bf16.mxu0 0
        %1070 = vmatmul.mubr.bf16.gmra.mrb[0].mxu0 %v588
        %v1071 = vpop.f32.mrb[0].mxu0
        %v1072 = vadd.f32 %v959, %v1071
        %v1073 = vpop.f32.mrb[0].mxu0
        %v1074 = vadd.f32 %v961, %v1073
        %v1075 = vpop.f32.mrb[0].mxu0
        %v1076 = vadd.f32 %v963, %v1075
        %v1077 = vpop.f32.mrb[0].mxu0
        %v1078 = vadd.f32 %v965, %v1077
        %1079 = vmatprep.mubr.bf16.mxu0 0
        %1080 = vmatmul.mubr.bf16.gmra.mrb[0].mxu0 %v590
        %v1081 = vpop.f32.mrb[0].mxu0
        %v1082 = vadd.f32 %v969, %v1081
        %v1083 = vpop.f32.mrb[0].mxu0
        %v1084 = vadd.f32 %v971, %v1083
        %v1085 = vpop.f32.mrb[0].mxu0
        %v1086 = vadd.f32 %v973, %v1085
        %v1087 = vpop.f32.mrb[0].mxu0
        %v1088 = vadd.f32 %v975, %v1087
        %1089 = vmatprep.mubr.bf16.mxu0 0
        %1090 = vmatmul.mubr.bf16.gmra.mrb[0].mxu0 %v592
        %v1091 = vpop.f32.mrb[0].mxu0
        %v1092 = vadd.f32 %v979, %v1091
        %v1093 = vpop.f32.mrb[0].mxu0
        %v1094 = vadd.f32 %v981, %v1093
        %v1095 = vpop.f32.mrb[0].mxu0
        %v1096 = vadd.f32 %v983, %v1095
        %v1097 = vpop.f32.mrb[0].mxu0
        %v1098 = vadd.f32 %v985, %v1097
        %1099 = vmatprep.mubr.bf16.mxu0 0
        %1100 = vmatmul.mubr.bf16.gmra.mrb[0].mxu0 %v594
        %v1101 = vpop.f32.mrb[0].mxu0
        %v1102 = vadd.f32 %v989, %v1101
        %v1103 = vpop.f32.mrb[0].mxu0
        %v1104 = vadd.f32 %v991, %v1103
        %v1105 = vpop.f32.mrb[0].mxu0
        %v1106 = vadd.f32 %v993, %v1105
        %v1107 = vpop.f32.mrb[0].mxu0
        %v1108 = vadd.f32 %v995, %v1107
        %1109 = vmatprep.mubr.bf16.mxu0 0
        %1110 = vmatmul.mubr.bf16.gmra.mrb[0].mxu0 %v596
        %v1111 = vpop.f32.mrb[0].mxu0
        %v1112 = vadd.f32 %v999, %v1111
        %v1113 = vpop.f32.mrb[0].mxu0
        %v1114 = vadd.f32 %v1001, %v1113
        %v1115 = vpop.f32.mrb[0].mxu0
        %v1116 = vadd.f32 %v1003, %v1115
        %v1117 = vpop.f32.mrb[0].mxu0
        %v1118 = vadd.f32 %v1005, %v1117
        %1119 = vdwg.mxu0
        %v1168 = vunpack.c.l.b16 %v419
        %v1169 = vunpack.c.h.b16 %v419
        %v1170 = vunpack.c.l.b16 %v420
        %v1171 = vunpack.c.h.b16 %v420
        %v1172 = vunpack.c.l.b16 %v421
        %v1173 = vunpack.c.h.b16 %v421
        %v1174 = vunpack.c.l.b16 %v422
        %v1175 = vunpack.c.h.b16 %v422
        %v1176 = vunpack.c.l.b16 %v423
        %v1177 = vunpack.c.h.b16 %v423
        %v1178 = vunpack.c.l.b16 %v424
        %v1179 = vunpack.c.h.b16 %v424
        %v1180 = vunpack.c.l.b16 %v425
        %v1181 = vunpack.c.h.b16 %v425
        %v1182 = vunpack.c.l.b16 %v426
        %v1183 = vunpack.c.h.b16 %v426
        %v1184 = vunpack.c.l.b16 %v427
        %v1185 = vunpack.c.h.b16 %v427
        %v1186 = vunpack.c.l.b16 %v428
        %v1187 = vunpack.c.h.b16 %v428
        %v1188 = vunpack.c.l.b16 %v429
        %v1189 = vunpack.c.h.b16 %v429
        %v1190 = vunpack.c.l.b16 %v430
        %v1191 = vunpack.c.h.b16 %v430
        %v1192 = vunpack.c.l.b16 %v431
        %v1193 = vunpack.c.h.b16 %v431
        %v1194 = vunpack.c.l.b16 %v432
        %v1195 = vunpack.c.h.b16 %v432
        %v1196 = vunpack.c.l.b16 %v433
        %v1197 = vunpack.c.h.b16 %v433
        %v1198 = vunpack.c.l.b16 %v434
        %v1199 = vunpack.c.h.b16 %v434
        %v1200 = vunpack.c.l.b16 %v435
        %v1201 = vunpack.c.h.b16 %v435
        %v1202 = vunpack.c.l.b16 %v436
        %v1203 = vunpack.c.h.b16 %v436
        %v1204 = vunpack.c.l.b16 %v437
        %v1205 = vunpack.c.h.b16 %v437
        %v1206 = vunpack.c.l.b16 %v438
        %v1207 = vunpack.c.h.b16 %v438
        %v1208 = vunpack.c.l.b16 %v439
        %v1209 = vunpack.c.h.b16 %v439
        %v1210 = vunpack.c.l.b16 %v440
        %v1211 = vunpack.c.h.b16 %v440
        %v1212 = vunpack.c.l.b16 %v441
        %v1213 = vunpack.c.h.b16 %v441
        %v1214 = vunpack.c.l.b16 %v442
        %v1215 = vunpack.c.h.b16 %v442
        %v1216 = vunpack.c.l.b16 %v443
        %v1217 = vunpack.c.h.b16 %v443
        %v1218 = vunpack.c.l.b16 %v444
        %v1219 = vunpack.c.h.b16 %v444
        %v1220 = vunpack.c.l.b16 %v445
        %v1221 = vunpack.c.h.b16 %v445
        %v1222 = vunpack.c.l.b16 %v446
        %v1223 = vunpack.c.h.b16 %v446
        %v1224 = vunpack.c.l.b16 %v447
        %v1225 = vunpack.c.h.b16 %v447
        %v1226 = vunpack.c.l.b16 %v448
        %v1227 = vunpack.c.h.b16 %v448
        %v1228 = vunpack.c.l.b16 %v449
        %v1229 = vunpack.c.h.b16 %v449
        %v1230 = vunpack.c.l.b16 %v450
        %v1231 = vunpack.c.h.b16 %v450
        %v1232 = vunpack.c.l.b16 %v451
        %v1233 = vunpack.c.h.b16 %v451
        %v1234 = vunpack.c.l.b16 %v452
        %v1235 = vunpack.c.h.b16 %v452
        %v1236 = vunpack.c.l.b16 %v453
        %v1237 = vunpack.c.h.b16 %v453
        %v1238 = vunpack.c.l.b16 %v454
        %v1239 = vunpack.c.h.b16 %v454
        %v1240 = vunpack.c.l.b16 %v455
        %v1241 = vunpack.c.h.b16 %v455
        %v1242 = vunpack.c.l.b16 %v456
        %v1243 = vunpack.c.h.b16 %v456
        %v1244 = vunpack.c.l.b16 %v457
        %v1245 = vunpack.c.h.b16 %v457
        %v1246 = vunpack.c.l.b16 %v458
        %v1247 = vunpack.c.h.b16 %v458
        %v1248 = vunpack.c.l.b16 %v459
        %v1249 = vunpack.c.h.b16 %v459
        %v1250 = vunpack.c.l.b16 %v460
        %v1251 = vunpack.c.h.b16 %v460
        %v1252 = vunpack.c.l.b16 %v461
        %v1253 = vunpack.c.h.b16 %v461
        %v1254 = vunpack.c.l.b16 %v462
        %v1255 = vunpack.c.h.b16 %v462
        %v1256 = vunpack.c.l.b16 %v463
        %v1257 = vunpack.c.h.b16 %v463
        %v1258 = vunpack.c.l.b16 %v464
        %v1259 = vunpack.c.h.b16 %v464
        %v1260 = vunpack.c.l.b16 %v465
        %v1261 = vunpack.c.h.b16 %v465
        %v1262 = vunpack.c.l.b16 %v466
        %v1263 = vunpack.c.h.b16 %v466
        %v1264 = vpack.c.b16 %v1170, %v1168
        %v1265 = vpack.c.b16 %v1171, %v1169
        %v1266 = vpack.c.b16 %v1174, %v1172
        %v1267 = vpack.c.b16 %v1175, %v1173
        %v1268 = vpack.c.b16 %v1178, %v1176
        %v1269 = vpack.c.b16 %v1179, %v1177
        %v1270 = vpack.c.b16 %v1182, %v1180
        %v1271 = vpack.c.b16 %v1183, %v1181
        %v1272 = vpack.c.b16 %v1186, %v1184
        %v1273 = vpack.c.b16 %v1187, %v1185
        %v1274 = vpack.c.b16 %v1190, %v1188
        %v1275 = vpack.c.b16 %v1191, %v1189
        %v1276 = vpack.c.b16 %v1194, %v1192
        %v1277 = vpack.c.b16 %v1195, %v1193
        %v1278 = vpack.c.b16 %v1198, %v1196
        %v1279 = vpack.c.b16 %v1199, %v1197
        %v1280 = vpack.c.b16 %v1202, %v1200
        %v1281 = vpack.c.b16 %v1203, %v1201
        %v1282 = vpack.c.b16 %v1206, %v1204
        %v1283 = vpack.c.b16 %v1207, %v1205
        %v1284 = vpack.c.b16 %v1210, %v1208
        %v1285 = vpack.c.b16 %v1211, %v1209
        %v1286 = vpack.c.b16 %v1214, %v1212
        %v1287 = vpack.c.b16 %v1215, %v1213
        %v1288 = vpack.c.b16 %v1218, %v1216
        %v1289 = vpack.c.b16 %v1219, %v1217
        %v1290 = vpack.c.b16 %v1222, %v1220
        %v1291 = vpack.c.b16 %v1223, %v1221
        %v1292 = vpack.c.b16 %v1226, %v1224
        %v1293 = vpack.c.b16 %v1227, %v1225
        %v1294 = vpack.c.b16 %v1230, %v1228
        %v1295 = vpack.c.b16 %v1231, %v1229
        %v1296 = vpack.c.b16 %v1234, %v1232
        %v1297 = vpack.c.b16 %v1235, %v1233
        %v1298 = vpack.c.b16 %v1238, %v1236
        %v1299 = vpack.c.b16 %v1239, %v1237
        %v1300 = vpack.c.b16 %v1242, %v1240
        %v1301 = vpack.c.b16 %v1243, %v1241
        %v1302 = vpack.c.b16 %v1246, %v1244
        %v1303 = vpack.c.b16 %v1247, %v1245
        %v1304 = vpack.c.b16 %v1250, %v1248
        %v1305 = vpack.c.b16 %v1251, %v1249
        %v1306 = vpack.c.b16 %v1254, %v1252
        %v1307 = vpack.c.b16 %v1255, %v1253
        %v1308 = vpack.c.b16 %v1258, %v1256
        %v1309 = vpack.c.b16 %v1259, %v1257
        %v1310 = vpack.c.b16 %v1262, %v1260
        %v1311 = vpack.c.b16 %v1263, %v1261
        %1360 = vmatprep.subr.bf16.mxu0 %v1265
        %1361 = vmatpush1.bf16.msra.mxu0 %v1264
        %1362 = vmatprep.subr.bf16.mxu0 %v1267
        %1363 = vmatpush1.bf16.msra.mxu0 %v1266
        %1364 = vmatprep.subr.bf16.mxu0 %v1269
        %1365 = vmatpush1.bf16.msra.mxu0 %v1268
        %1366 = vmatprep.subr.bf16.mxu0 %v1271
        %1367 = vmatpush1.bf16.msra.mxu0 %v1270
        %1368 = vmatprep.subr.bf16.mxu0 %v1273
        %1369 = vmatpush1.bf16.msra.mxu0 %v1272
        %1370 = vmatprep.subr.bf16.mxu0 %v1275
        %1371 = vmatpush1.bf16.msra.mxu0 %v1274
        %1372 = vmatprep.subr.bf16.mxu0 %v1277
        %1373 = vmatpush1.bf16.msra.mxu0 %v1276
        %1374 = vmatprep.subr.bf16.mxu0 %v1279
        %1375 = vmatpush1.bf16.msra.mxu0 %v1278
        %1376 = vmatprep.subr.bf16.mxu0 %v1281
        %1377 = vmatpush1.bf16.msra.mxu0 %v1280
        %1378 = vmatprep.subr.bf16.mxu0 %v1283
        %1379 = vmatpush1.bf16.msra.mxu0 %v1282
        %1380 = vmatprep.subr.bf16.mxu0 %v1285
        %1381 = vmatpush1.bf16.msra.mxu0 %v1284
        %1382 = vmatprep.subr.bf16.mxu0 %v1287
        %1383 = vmatpush1.bf16.msra.mxu0 %v1286
        %1384 = vmatprep.subr.bf16.mxu0 %v1289
        %1385 = vmatpush1.bf16.msra.mxu0 %v1288
        %1386 = vmatprep.subr.bf16.mxu0 %v1291
        %1387 = vmatpush1.bf16.msra.mxu0 %v1290
        %1388 = vmatprep.subr.bf16.mxu0 %v1293
        %1389 = vmatpush1.bf16.msra.mxu0 %v1292
        %1390 = vmatprep.subr.bf16.mxu0 %v1295
        %1391 = vmatpush1.bf16.msra.mxu0 %v1294
        %1392 = vmatprep.mubr.bf16.mxu0 %v319
        %1393 = vmatmul.mubr.bf16.gmra.mrb[0].mxu0 %v298
        %v1394 = vpop.f32.mrb[0].mxu0
        %v1395 = vadd.f32 %v1042, %v1394
        %v1396 = vpop.f32.mrb[0].mxu0
        %v1397 = vadd.f32 %v1044, %v1396
        %v1398 = vpop.f32.mrb[0].mxu0
        %v1399 = vadd.f32 %v1046, %v1398
        %v1400 = vpop.f32.mrb[0].mxu0
        %v1401 = vadd.f32 %v1048, %v1400
        %1402 = vmatprep.mubr.bf16.mxu0 %v327
        %1403 = vmatmul.mubr.bf16.gmra.mrb[0].mxu0 %v299
        %v1404 = vpop.f32.mrb[0].mxu0
        %v1405 = vadd.f32 %v1052, %v1404
        %v1406 = vpop.f32.mrb[0].mxu0
        %v1407 = vadd.f32 %v1054, %v1406
        %v1408 = vpop.f32.mrb[0].mxu0
        %v1409 = vadd.f32 %v1056, %v1408
        %v1410 = vpop.f32.mrb[0].mxu0
        %v1411 = vadd.f32 %v1058, %v1410
        %1412 = vmatprep.mubr.bf16.mxu0 %v335
        %1413 = vmatmul.mubr.bf16.gmra.mrb[0].mxu0 %v300
        %v1414 = vpop.f32.mrb[0].mxu0
        %v1415 = vadd.f32 %v1062, %v1414
        %v1416 = vpop.f32.mrb[0].mxu0
        %v1417 = vadd.f32 %v1064, %v1416
        %v1418 = vpop.f32.mrb[0].mxu0
        %v1419 = vadd.f32 %v1066, %v1418
        %v1420 = vpop.f32.mrb[0].mxu0
        %v1421 = vadd.f32 %v1068, %v1420
        %1422 = vmatprep.mubr.bf16.mxu0 %v343
        %1423 = vmatmul.mubr.bf16.gmra.mrb[0].mxu0 %v301
        %v1424 = vpop.f32.mrb[0].mxu0
        %v1425 = vadd.f32 %v1072, %v1424
        %v1426 = vpop.f32.mrb[0].mxu0
        %v1427 = vadd.f32 %v1074, %v1426
        %v1428 = vpop.f32.mrb[0].mxu0
        %v1429 = vadd.f32 %v1076, %v1428
        %v1430 = vpop.f32.mrb[0].mxu0
        %v1431 = vadd.f32 %v1078, %v1430
        %1432 = vmatprep.mubr.bf16.mxu0 %v351
        %1433 = vmatmul.mubr.bf16.gmra.mrb[0].mxu0 %v302
        %v1434 = vpop.f32.mrb[0].mxu0
        %v1435 = vadd.f32 %v1082, %v1434
        %v1436 = vpop.f32.mrb[0].mxu0
        %v1437 = vadd.f32 %v1084, %v1436
        %v1438 = vpop.f32.mrb[0].mxu0
        %v1439 = vadd.f32 %v1086, %v1438
        %v1440 = vpop.f32.mrb[0].mxu0
        %v1441 = vadd.f32 %v1088, %v1440
        %1442 = vmatprep.mubr.bf16.mxu0 %v359
        %1443 = vmatmul.mubr.bf16.gmra.mrb[0].mxu0 %v303
        %v1444 = vpop.f32.mrb[0].mxu0
        %v1445 = vadd.f32 %v1092, %v1444
        %v1446 = vpop.f32.mrb[0].mxu0
        %v1447 = vadd.f32 %v1094, %v1446
        %v1448 = vpop.f32.mrb[0].mxu0
        %v1449 = vadd.f32 %v1096, %v1448
        %v1450 = vpop.f32.mrb[0].mxu0
        %v1451 = vadd.f32 %v1098, %v1450
        %1452 = vmatprep.mubr.bf16.mxu0 %v367
        %1453 = vmatmul.mubr.bf16.gmra.mrb[0].mxu0 %v304
        %v1454 = vpop.f32.mrb[0].mxu0
        %v1455 = vadd.f32 %v1102, %v1454
        %v1456 = vpop.f32.mrb[0].mxu0
        %v1457 = vadd.f32 %v1104, %v1456
        %v1458 = vpop.f32.mrb[0].mxu0
        %v1459 = vadd.f32 %v1106, %v1458
        %v1460 = vpop.f32.mrb[0].mxu0
        %v1461 = vadd.f32 %v1108, %v1460
        %1462 = vmatprep.mubr.bf16.mxu0 %v375
        %1463 = vmatmul.mubr.bf16.gmra.mrb[0].mxu0 %v305
        %v1464 = vpop.f32.mrb[0].mxu0
        %v1465 = vadd.f32 %v1112, %v1464
        %v1466 = vpop.f32.mrb[0].mxu0
        %v1467 = vadd.f32 %v1114, %v1466
        %v1468 = vpop.f32.mrb[0].mxu0
        %v1469 = vadd.f32 %v1116, %v1468
        %v1470 = vpop.f32.mrb[0].mxu0
        %v1471 = vadd.f32 %v1118, %v1470
        %1472 = vdwg.mxu0
        %1473 = vmatprep.subr.bf16.mxu0 %v1297
        %1474 = vmatpush1.bf16.msra.mxu0 %v1296
        %1475 = vmatprep.subr.bf16.mxu0 %v1299
        %1476 = vmatpush1.bf16.msra.mxu0 %v1298
        %1477 = vmatprep.subr.bf16.mxu0 %v1301
        %1478 = vmatpush1.bf16.msra.mxu0 %v1300
        %1479 = vmatprep.subr.bf16.mxu0 %v1303
        %1480 = vmatpush1.bf16.msra.mxu0 %v1302
        %1481 = vmatprep.subr.bf16.mxu0 %v1305
        %1482 = vmatpush1.bf16.msra.mxu0 %v1304
        %1483 = vmatprep.subr.bf16.mxu0 %v1307
        %1484 = vmatpush1.bf16.msra.mxu0 %v1306
        %1485 = vmatprep.subr.bf16.mxu0 %v1309
        %1486 = vmatpush1.bf16.msra.mxu0 %v1308
        %1487 = vmatprep.subr.bf16.mxu0 %v1311
        %1488 = vmatpush1.bf16.msra.mxu0 %v1310
        %1489 = vmatprep.subr.bf16.mxu0 0
        %1490 = vmatpush1.bf16.msra.mxu0 0
        %1491 = vmatprep.subr.bf16.mxu0 0
        %1492 = vmatpush1.bf16.msra.mxu0 0
        %1493 = vmatprep.subr.bf16.mxu0 0
        %1494 = vmatpush1.bf16.msra.mxu0 0
        %1495 = vmatprep.subr.bf16.mxu0 0
        %1496 = vmatpush1.bf16.msra.mxu0 0
        %1497 = vmatprep.subr.bf16.mxu0 0
        %1498 = vmatpush1.bf16.msra.mxu0 0
        %1499 = vmatprep.subr.bf16.mxu0 0
        %1500 = vmatpush1.bf16.msra.mxu0 0
        %1501 = vmatprep.subr.bf16.mxu0 0
        %1502 = vmatpush1.bf16.msra.mxu0 0
        %1503 = vmatprep.subr.bf16.mxu0 0
        %1504 = vmatpush1.bf16.msra.mxu0 0
        %1505 = vmatprep.mubr.bf16.mxu0 0
        %1506 = vmatmul.mubr.bf16.gmra.mrb[0].mxu0 %v396
        %v1507 = vpop.f32.mrb[0].mxu0
        %v1508 = vadd.f32 %v1395, %v1507
        %v1509 = vpop.f32.mrb[0].mxu0
        %v1510 = vadd.f32 %v1397, %v1509
        %v1511 = vpop.f32.mrb[0].mxu0
        %v1512 = vadd.f32 %v1399, %v1511
        %v1513 = vpop.f32.mrb[0].mxu0
        %v1514 = vadd.f32 %v1401, %v1513
        %1515 = vmatprep.mubr.bf16.mxu0 0
        %1516 = vmatmul.mubr.bf16.gmra.mrb[0].mxu0 %v398
        %v1517 = vpop.f32.mrb[0].mxu0
        %v1518 = vadd.f32 %v1405, %v1517
        %v1519 = vpop.f32.mrb[0].mxu0
        %v1520 = vadd.f32 %v1407, %v1519
        %v1521 = vpop.f32.mrb[0].mxu0
        %v1522 = vadd.f32 %v1409, %v1521
        %v1523 = vpop.f32.mrb[0].mxu0
        %v1524 = vadd.f32 %v1411, %v1523
        %1525 = vmatprep.mubr.bf16.mxu0 0
        %1526 = vmatmul.mubr.bf16.gmra.mrb[0].mxu0 %v400
        %v1527 = vpop.f32.mrb[0].mxu0
        %v1528 = vadd.f32 %v1415, %v1527
        %v1529 = vpop.f32.mrb[0].mxu0
        %v1530 = vadd.f32 %v1417, %v1529
        %v1531 = vpop.f32.mrb[0].mxu0
        %v1532 = vadd.f32 %v1419, %v1531
        %v1533 = vpop.f32.mrb[0].mxu0
        %v1534 = vadd.f32 %v1421, %v1533
        %1535 = vmatprep.mubr.bf16.mxu0 0
        %1536 = vmatmul.mubr.bf16.gmra.mrb[0].mxu0 %v402
        %v1537 = vpop.f32.mrb[0].mxu0
        %v1538 = vadd.f32 %v1425, %v1537
        %v1539 = vpop.f32.mrb[0].mxu0
        %v1540 = vadd.f32 %v1427, %v1539
        %v1541 = vpop.f32.mrb[0].mxu0
        %v1542 = vadd.f32 %v1429, %v1541
        %v1543 = vpop.f32.mrb[0].mxu0
        %v1544 = vadd.f32 %v1431, %v1543
        %1545 = vmatprep.mubr.bf16.mxu0 0
        %1546 = vmatmul.mubr.bf16.gmra.mrb[0].mxu0 %v404
        %v1547 = vpop.f32.mrb[0].mxu0
        %v1548 = vadd.f32 %v1435, %v1547
        %v1549 = vpop.f32.mrb[0].mxu0
        %v1550 = vadd.f32 %v1437, %v1549
        %v1551 = vpop.f32.mrb[0].mxu0
        %v1552 = vadd.f32 %v1439, %v1551
        %v1553 = vpop.f32.mrb[0].mxu0
        %v1554 = vadd.f32 %v1441, %v1553
        %1555 = vmatprep.mubr.bf16.mxu0 0
        %1556 = vmatmul.mubr.bf16.gmra.mrb[0].mxu0 %v406
        %v1557 = vpop.f32.mrb[0].mxu0
        %v1558 = vadd.f32 %v1445, %v1557
        %v1559 = vpop.f32.mrb[0].mxu0
        %v1560 = vadd.f32 %v1447, %v1559
        %v1561 = vpop.f32.mrb[0].mxu0
        %v1562 = vadd.f32 %v1449, %v1561
        %v1563 = vpop.f32.mrb[0].mxu0
        %v1564 = vadd.f32 %v1451, %v1563
        %1565 = vmatprep.mubr.bf16.mxu0 0
        %1566 = vmatmul.mubr.bf16.gmra.mrb[0].mxu0 %v408
        %v1567 = vpop.f32.mrb[0].mxu0
        %v1568 = vadd.f32 %v1455, %v1567
        %v1569 = vpop.f32.mrb[0].mxu0
        %v1570 = vadd.f32 %v1457, %v1569
        %v1571 = vpop.f32.mrb[0].mxu0
        %v1572 = vadd.f32 %v1459, %v1571
        %v1573 = vpop.f32.mrb[0].mxu0
        %v1574 = vadd.f32 %v1461, %v1573
        %1575 = vmatprep.mubr.bf16.mxu0 0
        %1576 = vmatmul.mubr.bf16.gmra.mrb[0].mxu0 %v410
        %v1577 = vpop.f32.mrb[0].mxu0
        %v1578 = vadd.f32 %v1465, %v1577
        %v1579 = vpop.f32.mrb[0].mxu0
        %v1580 = vadd.f32 %v1467, %v1579
        %v1581 = vpop.f32.mrb[0].mxu0
        %v1582 = vadd.f32 %v1469, %v1581
        %v1583 = vpop.f32.mrb[0].mxu0
        %v1584 = vadd.f32 %v1471, %v1583
        %1585 = vdwg.mxu0
        %s1586 = sadd.s32 %s199, 64
        %s1587 = scalar_lea.vmem %s0, %s1586
        %v1588 = vld [vmem:[%s1587] sm:$0xff]
        %v1589 = vld [vmem:[%s1587 + $0x8] sm:$0xff]
        %v1590 = vld [vmem:[%s1587 + $0x10] sm:$0xff]
        %v1591 = vld [vmem:[%s1587 + $0x18] sm:$0xff]
        %v1592 = vld [vmem:[%s1587 + $0x20] sm:$0xff]
        %v1593 = vld [vmem:[%s1587 + $0x28] sm:$0xff]
        %v1594 = vld [vmem:[%s1587 + $0x30] sm:$0xff]
        %v1595 = vld [vmem:[%s1587 + $0x38] sm:$0xff]
        %v1596 = vld [vmem:[%s1587 + $0x40] sm:$0xff]
        %v1597 = vld [vmem:[%s1587 + $0x48] sm:$0xff]
        %v1598 = vld [vmem:[%s1587 + $0x50] sm:$0xff]
        %v1599 = vld [vmem:[%s1587 + $0x58] sm:$0xff]
        %v1600 = vld [vmem:[%s1587 + $0x60] sm:$0xff]
        %v1601 = vld [vmem:[%s1587 + $0x68] sm:$0xff]
        %v1602 = vld [vmem:[%s1587 + $0x70] sm:$0xff]
        %v1603 = vld [vmem:[%s1587 + $0x78] sm:$0xff]
        %v1604 = vld [vmem:[%s1587 + $0x80] sm:$0xff]
        %v1605 = vpack.c.bf16 %v1589, %v1588
        %v1606 = vpack.c.bf16 %v1591, %v1590
        %v1607 = vpack.c.bf16 %v1593, %v1592
        %v1608 = vpack.c.bf16 %v1595, %v1594
        %v1609 = vpack.c.bf16 %v1597, %v1596
        %v1610 = vpack.c.bf16 %v1599, %v1598
        %v1611 = vpack.c.bf16 %v1601, %v1600
        %v1612 = vpack.c.bf16 %v1603, %v1602
        %v1613 = vpack.c.bf16 %v1604, %v1604
        %v1615 = vshrl.u32 %v1605, 16
        %v1617 = vshll.u32 %v1605, 16
        %v1619 = vrot.slane %v1617, 1
        %v1620 = vor.u32 %v1615, %v1619
        %v1622 = vshll.u32 %v1606, 16
        %v1624 = vrot.slane %v1622, 1
        %v1625 = vsel %vm307, %v1620, %v1624
        %v1626 = vshrl.u32 %v1606, 16
        %v1628 = vor.u32 %v1626, %v1624
        %v1630 = vshll.u32 %v1607, 16
        %v1632 = vrot.slane %v1630, 1
        %v1633 = vsel %vm307, %v1628, %v1632
        %v1634 = vshrl.u32 %v1607, 16
        %v1636 = vor.u32 %v1634, %v1632
        %v1638 = vshll.u32 %v1608, 16
        %v1640 = vrot.slane %v1638, 1
        %v1641 = vsel %vm307, %v1636, %v1640
        %v1642 = vshrl.u32 %v1608, 16
        %v1644 = vor.u32 %v1642, %v1640
        %v1646 = vshll.u32 %v1609, 16
        %v1648 = vrot.slane %v1646, 1
        %v1649 = vsel %vm307, %v1644, %v1648
        %v1650 = vshrl.u32 %v1609, 16
        %v1652 = vor.u32 %v1650, %v1648
        %v1654 = vshll.u32 %v1610, 16
        %v1656 = vrot.slane %v1654, 1
        %v1657 = vsel %vm307, %v1652, %v1656
        %v1658 = vshrl.u32 %v1610, 16
        %v1660 = vor.u32 %v1658, %v1656
        %v1662 = vshll.u32 %v1611, 16
        %v1664 = vrot.slane %v1662, 1
        %v1665 = vsel %vm307, %v1660, %v1664
        %v1666 = vshrl.u32 %v1611, 16
        %v1668 = vor.u32 %v1666, %v1664
        %v1670 = vshll.u32 %v1612, 16
        %v1672 = vrot.slane %v1670, 1
        %v1673 = vsel %vm307, %v1668, %v1672
        %v1674 = vshrl.u32 %v1612, 16
        %v1676 = vor.u32 %v1674, %v1672
        %v1678 = vshll.u32 %v1613, 16
        %v1680 = vrot.slane %v1678, 1
        %v1681 = vsel %vm307, %v1676, %v1680
        %v1699 = vrot.slane %v1605, 1
        %v1700 = vrot.slane %v1606, 1
        %v1701 = vsel %vm393, %v1699, %v1700
        %v1702 = vrot.slane %v1607, 1
        %v1703 = vsel %vm393, %v1700, %v1702
        %v1704 = vrot.slane %v1608, 1
        %v1705 = vsel %vm393, %v1702, %v1704
        %v1706 = vrot.slane %v1609, 1
        %v1707 = vsel %vm393, %v1704, %v1706
        %v1708 = vrot.slane %v1610, 1
        %v1709 = vsel %vm393, %v1706, %v1708
        %v1710 = vrot.slane %v1611, 1
        %v1711 = vsel %vm393, %v1708, %v1710
        %v1712 = vrot.slane %v1612, 1
        %v1713 = vsel %vm393, %v1710, %v1712
        %v1714 = vrot.slane %v1613, 1
        %v1715 = vsel %vm393, %v1712, %v1714
        %s1724 = scalar_lea.vmem %s1, 768
        %v1725 = vld [vmem:[%s1724] sm:$0xff]
        %v1726 = vld [vmem:[%s1724 + $0x8] sm:$0xff]
        %v1727 = vld [vmem:[%s1724 + $0x10] sm:$0xff]
        %v1728 = vld [vmem:[%s1724 + $0x18] sm:$0xff]
        %v1729 = vld [vmem:[%s1724 + $0x20] sm:$0xff]
        %v1730 = vld [vmem:[%s1724 + $0x28] sm:$0xff]
        %v1731 = vld [vmem:[%s1724 + $0x30] sm:$0xff]
        %v1732 = vld [vmem:[%s1724 + $0x38] sm:$0xff]
        %v1733 = vld [vmem:[%s1724 + $0x40] sm:$0xff]
        %v1734 = vld [vmem:[%s1724 + $0x48] sm:$0xff]
        %v1735 = vld [vmem:[%s1724 + $0x50] sm:$0xff]
        %v1736 = vld [vmem:[%s1724 + $0x58] sm:$0xff]
        %v1737 = vld [vmem:[%s1724 + $0x60] sm:$0xff]
        %v1738 = vld [vmem:[%s1724 + $0x68] sm:$0xff]
        %v1739 = vld [vmem:[%s1724 + $0x70] sm:$0xff]
        %v1740 = vld [vmem:[%s1724 + $0x78] sm:$0xff]
        %v1741 = vld [vmem:[%s1724 + $0x80] sm:$0xff]
        %v1742 = vld [vmem:[%s1724 + $0x88] sm:$0xff]
        %v1743 = vld [vmem:[%s1724 + $0x90] sm:$0xff]
        %v1744 = vld [vmem:[%s1724 + $0x98] sm:$0xff]
        %v1745 = vld [vmem:[%s1724 + $0xa0] sm:$0xff]
        %v1746 = vld [vmem:[%s1724 + $0xa8] sm:$0xff]
        %v1747 = vld [vmem:[%s1724 + $0xb0] sm:$0xff]
        %v1748 = vld [vmem:[%s1724 + $0xb8] sm:$0xff]
        %v1749 = vld [vmem:[%s1724 + $0xc0] sm:$0xff]
        %v1750 = vld [vmem:[%s1724 + $0xc8] sm:$0xff]
        %v1751 = vld [vmem:[%s1724 + $0xd0] sm:$0xff]
        %v1752 = vld [vmem:[%s1724 + $0xd8] sm:$0xff]
        %v1753 = vld [vmem:[%s1724 + $0xe0] sm:$0xff]
        %v1754 = vld [vmem:[%s1724 + $0xe8] sm:$0xff]
        %v1755 = vld [vmem:[%s1724 + $0xf0] sm:$0xff]
        %v1756 = vld [vmem:[%s1724 + $0xf8] sm:$0xff]
        %v1757 = vld [vmem:[%s1724 + $0x100] sm:$0xff]
        %v1758 = vld [vmem:[%s1724 + $0x108] sm:$0xff]
        %v1759 = vld [vmem:[%s1724 + $0x110] sm:$0xff]
        %v1760 = vld [vmem:[%s1724 + $0x118] sm:$0xff]
        %v1761 = vld [vmem:[%s1724 + $0x120] sm:$0xff]
        %v1762 = vld [vmem:[%s1724 + $0x128] sm:$0xff]
        %v1763 = vld [vmem:[%s1724 + $0x130] sm:$0xff]
        %v1764 = vld [vmem:[%s1724 + $0x138] sm:$0xff]
        %v1765 = vld [vmem:[%s1724 + $0x140] sm:$0xff]
        %v1766 = vld [vmem:[%s1724 + $0x148] sm:$0xff]
        %v1767 = vld [vmem:[%s1724 + $0x150] sm:$0xff]
        %v1768 = vld [vmem:[%s1724 + $0x158] sm:$0xff]
        %v1769 = vld [vmem:[%s1724 + $0x160] sm:$0xff]
        %v1770 = vld [vmem:[%s1724 + $0x168] sm:$0xff]
        %v1771 = vld [vmem:[%s1724 + $0x170] sm:$0xff]
        %v1772 = vld [vmem:[%s1724 + $0x178] sm:$0xff]
        %v1821 = vunpack.c.l.b16 %v1725
        %v1822 = vunpack.c.h.b16 %v1725
        %v1823 = vunpack.c.l.b16 %v1726
        %v1824 = vunpack.c.h.b16 %v1726
        %v1825 = vunpack.c.l.b16 %v1727
        %v1826 = vunpack.c.h.b16 %v1727
        %v1827 = vunpack.c.l.b16 %v1728
        %v1828 = vunpack.c.h.b16 %v1728
        %v1829 = vunpack.c.l.b16 %v1729
        %v1830 = vunpack.c.h.b16 %v1729
        %v1831 = vunpack.c.l.b16 %v1730
        %v1832 = vunpack.c.h.b16 %v1730
        %v1833 = vunpack.c.l.b16 %v1731
        %v1834 = vunpack.c.h.b16 %v1731
        %v1835 = vunpack.c.l.b16 %v1732
        %v1836 = vunpack.c.h.b16 %v1732
        %v1837 = vunpack.c.l.b16 %v1733
        %v1838 = vunpack.c.h.b16 %v1733
        %v1839 = vunpack.c.l.b16 %v1734
        %v1840 = vunpack.c.h.b16 %v1734
        %v1841 = vunpack.c.l.b16 %v1735
        %v1842 = vunpack.c.h.b16 %v1735
        %v1843 = vunpack.c.l.b16 %v1736
        %v1844 = vunpack.c.h.b16 %v1736
        %v1845 = vunpack.c.l.b16 %v1737
        %v1846 = vunpack.c.h.b16 %v1737
        %v1847 = vunpack.c.l.b16 %v1738
        %v1848 = vunpack.c.h.b16 %v1738
        %v1849 = vunpack.c.l.b16 %v1739
        %v1850 = vunpack.c.h.b16 %v1739
        %v1851 = vunpack.c.l.b16 %v1740
        %v1852 = vunpack.c.h.b16 %v1740
        %v1853 = vunpack.c.l.b16 %v1741
        %v1854 = vunpack.c.h.b16 %v1741
        %v1855 = vunpack.c.l.b16 %v1742
        %v1856 = vunpack.c.h.b16 %v1742
        %v1857 = vunpack.c.l.b16 %v1743
        %v1858 = vunpack.c.h.b16 %v1743
        %v1859 = vunpack.c.l.b16 %v1744
        %v1860 = vunpack.c.h.b16 %v1744
        %v1861 = vunpack.c.l.b16 %v1745
        %v1862 = vunpack.c.h.b16 %v1745
        %v1863 = vunpack.c.l.b16 %v1746
        %v1864 = vunpack.c.h.b16 %v1746
        %v1865 = vunpack.c.l.b16 %v1747
        %v1866 = vunpack.c.h.b16 %v1747
        %v1867 = vunpack.c.l.b16 %v1748
        %v1868 = vunpack.c.h.b16 %v1748
        %v1869 = vunpack.c.l.b16 %v1749
        %v1870 = vunpack.c.h.b16 %v1749
        %v1871 = vunpack.c.l.b16 %v1750
        %v1872 = vunpack.c.h.b16 %v1750
        %v1873 = vunpack.c.l.b16 %v1751
        %v1874 = vunpack.c.h.b16 %v1751
        %v1875 = vunpack.c.l.b16 %v1752
        %v1876 = vunpack.c.h.b16 %v1752
        %v1877 = vunpack.c.l.b16 %v1753
        %v1878 = vunpack.c.h.b16 %v1753
        %v1879 = vunpack.c.l.b16 %v1754
        %v1880 = vunpack.c.h.b16 %v1754
        %v1881 = vunpack.c.l.b16 %v1755
        %v1882 = vunpack.c.h.b16 %v1755
        %v1883 = vunpack.c.l.b16 %v1756
        %v1884 = vunpack.c.h.b16 %v1756
        %v1885 = vunpack.c.l.b16 %v1757
        %v1886 = vunpack.c.h.b16 %v1757
        %v1887 = vunpack.c.l.b16 %v1758
        %v1888 = vunpack.c.h.b16 %v1758
        %v1889 = vunpack.c.l.b16 %v1759
        %v1890 = vunpack.c.h.b16 %v1759
        %v1891 = vunpack.c.l.b16 %v1760
        %v1892 = vunpack.c.h.b16 %v1760
        %v1893 = vunpack.c.l.b16 %v1761
        %v1894 = vunpack.c.h.b16 %v1761
        %v1895 = vunpack.c.l.b16 %v1762
        %v1896 = vunpack.c.h.b16 %v1762
        %v1897 = vunpack.c.l.b16 %v1763
        %v1898 = vunpack.c.h.b16 %v1763
        %v1899 = vunpack.c.l.b16 %v1764
        %v1900 = vunpack.c.h.b16 %v1764
        %v1901 = vunpack.c.l.b16 %v1765
        %v1902 = vunpack.c.h.b16 %v1765
        %v1903 = vunpack.c.l.b16 %v1766
        %v1904 = vunpack.c.h.b16 %v1766
        %v1905 = vunpack.c.l.b16 %v1767
        %v1906 = vunpack.c.h.b16 %v1767
        %v1907 = vunpack.c.l.b16 %v1768
        %v1908 = vunpack.c.h.b16 %v1768
        %v1909 = vunpack.c.l.b16 %v1769
        %v1910 = vunpack.c.h.b16 %v1769
        %v1911 = vunpack.c.l.b16 %v1770
        %v1912 = vunpack.c.h.b16 %v1770
        %v1913 = vunpack.c.l.b16 %v1771
        %v1914 = vunpack.c.h.b16 %v1771
        %v1915 = vunpack.c.l.b16 %v1772
        %v1916 = vunpack.c.h.b16 %v1772
        %v1917 = vpack.c.b16 %v1823, %v1821
        %v1918 = vpack.c.b16 %v1824, %v1822
        %v1919 = vpack.c.b16 %v1827, %v1825
        %v1920 = vpack.c.b16 %v1828, %v1826
        %v1921 = vpack.c.b16 %v1831, %v1829
        %v1922 = vpack.c.b16 %v1832, %v1830
        %v1923 = vpack.c.b16 %v1835, %v1833
        %v1924 = vpack.c.b16 %v1836, %v1834
        %v1925 = vpack.c.b16 %v1839, %v1837
        %v1926 = vpack.c.b16 %v1840, %v1838
        %v1927 = vpack.c.b16 %v1843, %v1841
        %v1928 = vpack.c.b16 %v1844, %v1842
        %v1929 = vpack.c.b16 %v1847, %v1845
        %v1930 = vpack.c.b16 %v1848, %v1846
        %v1931 = vpack.c.b16 %v1851, %v1849
        %v1932 = vpack.c.b16 %v1852, %v1850
        %v1933 = vpack.c.b16 %v1855, %v1853
        %v1934 = vpack.c.b16 %v1856, %v1854
        %v1935 = vpack.c.b16 %v1859, %v1857
        %v1936 = vpack.c.b16 %v1860, %v1858
        %v1937 = vpack.c.b16 %v1863, %v1861
        %v1938 = vpack.c.b16 %v1864, %v1862
        %v1939 = vpack.c.b16 %v1867, %v1865
        %v1940 = vpack.c.b16 %v1868, %v1866
        %v1941 = vpack.c.b16 %v1871, %v1869
        %v1942 = vpack.c.b16 %v1872, %v1870
        %v1943 = vpack.c.b16 %v1875, %v1873
        %v1944 = vpack.c.b16 %v1876, %v1874
        %v1945 = vpack.c.b16 %v1879, %v1877
        %v1946 = vpack.c.b16 %v1880, %v1878
        %v1947 = vpack.c.b16 %v1883, %v1881
        %v1948 = vpack.c.b16 %v1884, %v1882
        %v1949 = vpack.c.b16 %v1887, %v1885
        %v1950 = vpack.c.b16 %v1888, %v1886
        %v1951 = vpack.c.b16 %v1891, %v1889
        %v1952 = vpack.c.b16 %v1892, %v1890
        %v1953 = vpack.c.b16 %v1895, %v1893
        %v1954 = vpack.c.b16 %v1896, %v1894
        %v1955 = vpack.c.b16 %v1899, %v1897
        %v1956 = vpack.c.b16 %v1900, %v1898
        %v1957 = vpack.c.b16 %v1903, %v1901
        %v1958 = vpack.c.b16 %v1904, %v1902
        %v1959 = vpack.c.b16 %v1907, %v1905
        %v1960 = vpack.c.b16 %v1908, %v1906
        %v1961 = vpack.c.b16 %v1911, %v1909
        %v1962 = vpack.c.b16 %v1912, %v1910
        %v1963 = vpack.c.b16 %v1915, %v1913
        %v1964 = vpack.c.b16 %v1916, %v1914
        %2013 = vmatprep.subr.bf16.mxu0 %v1918
        %2014 = vmatpush1.bf16.msra.mxu0 %v1917
        %2015 = vmatprep.subr.bf16.mxu0 %v1920
        %2016 = vmatpush1.bf16.msra.mxu0 %v1919
        %2017 = vmatprep.subr.bf16.mxu0 %v1922
        %2018 = vmatpush1.bf16.msra.mxu0 %v1921
        %2019 = vmatprep.subr.bf16.mxu0 %v1924
        %2020 = vmatpush1.bf16.msra.mxu0 %v1923
        %2021 = vmatprep.subr.bf16.mxu0 %v1926
        %2022 = vmatpush1.bf16.msra.mxu0 %v1925
        %2023 = vmatprep.subr.bf16.mxu0 %v1928
        %2024 = vmatpush1.bf16.msra.mxu0 %v1927
        %2025 = vmatprep.subr.bf16.mxu0 %v1930
        %2026 = vmatpush1.bf16.msra.mxu0 %v1929
        %2027 = vmatprep.subr.bf16.mxu0 %v1932
        %2028 = vmatpush1.bf16.msra.mxu0 %v1931
        %2029 = vmatprep.subr.bf16.mxu0 %v1934
        %2030 = vmatpush1.bf16.msra.mxu0 %v1933
        %2031 = vmatprep.subr.bf16.mxu0 %v1936
        %2032 = vmatpush1.bf16.msra.mxu0 %v1935
        %2033 = vmatprep.subr.bf16.mxu0 %v1938
        %2034 = vmatpush1.bf16.msra.mxu0 %v1937
        %2035 = vmatprep.subr.bf16.mxu0 %v1940
        %2036 = vmatpush1.bf16.msra.mxu0 %v1939
        %2037 = vmatprep.subr.bf16.mxu0 %v1942
        %2038 = vmatpush1.bf16.msra.mxu0 %v1941
        %2039 = vmatprep.subr.bf16.mxu0 %v1944
        %2040 = vmatpush1.bf16.msra.mxu0 %v1943
        %2041 = vmatprep.subr.bf16.mxu0 %v1946
        %2042 = vmatpush1.bf16.msra.mxu0 %v1945
        %2043 = vmatprep.subr.bf16.mxu0 %v1948
        %2044 = vmatpush1.bf16.msra.mxu0 %v1947
        %2045 = vmatprep.mubr.bf16.mxu0 %v1625
        %2046 = vmatmul.mubr.bf16.gmra.mrb[0].mxu0 %v1605
        %v2047 = vpop.f32.mrb[0].mxu0
        %v2048 = vadd.f32 0.0, %v2047
        %v2049 = vpop.f32.mrb[0].mxu0
        %v2050 = vadd.f32 0.0, %v2049
        %v2051 = vpop.f32.mrb[0].mxu0
        %v2052 = vadd.f32 0.0, %v2051
        %v2053 = vpop.f32.mrb[0].mxu0
        %v2054 = vadd.f32 0.0, %v2053
        %2055 = vmatprep.mubr.bf16.mxu0 %v1633
        %2056 = vmatmul.mubr.bf16.gmra.mrb[0].mxu0 %v1606
        %v2057 = vpop.f32.mrb[0].mxu0
        %v2058 = vadd.f32 0.0, %v2057
        %v2059 = vpop.f32.mrb[0].mxu0
        %v2060 = vadd.f32 0.0, %v2059
        %v2061 = vpop.f32.mrb[0].mxu0
        %v2062 = vadd.f32 0.0, %v2061
        %v2063 = vpop.f32.mrb[0].mxu0
        %v2064 = vadd.f32 0.0, %v2063
        %2065 = vmatprep.mubr.bf16.mxu0 %v1641
        %2066 = vmatmul.mubr.bf16.gmra.mrb[0].mxu0 %v1607
        %v2067 = vpop.f32.mrb[0].mxu0
        %v2068 = vadd.f32 0.0, %v2067
        %v2069 = vpop.f32.mrb[0].mxu0
        %v2070 = vadd.f32 0.0, %v2069
        %v2071 = vpop.f32.mrb[0].mxu0
        %v2072 = vadd.f32 0.0, %v2071
        %v2073 = vpop.f32.mrb[0].mxu0
        %v2074 = vadd.f32 0.0, %v2073
        %2075 = vmatprep.mubr.bf16.mxu0 %v1649
        %2076 = vmatmul.mubr.bf16.gmra.mrb[0].mxu0 %v1608
        %v2077 = vpop.f32.mrb[0].mxu0
        %v2078 = vadd.f32 0.0, %v2077
        %v2079 = vpop.f32.mrb[0].mxu0
        %v2080 = vadd.f32 0.0, %v2079
        %v2081 = vpop.f32.mrb[0].mxu0
        %v2082 = vadd.f32 0.0, %v2081
        %v2083 = vpop.f32.mrb[0].mxu0
        %v2084 = vadd.f32 0.0, %v2083
        %2085 = vmatprep.mubr.bf16.mxu0 %v1657
        %2086 = vmatmul.mubr.bf16.gmra.mrb[0].mxu0 %v1609
        %v2087 = vpop.f32.mrb[0].mxu0
        %v2088 = vadd.f32 0.0, %v2087
        %v2089 = vpop.f32.mrb[0].mxu0
        %v2090 = vadd.f32 0.0, %v2089
        %v2091 = vpop.f32.mrb[0].mxu0
        %v2092 = vadd.f32 0.0, %v2091
        %v2093 = vpop.f32.mrb[0].mxu0
        %v2094 = vadd.f32 0.0, %v2093
        %2095 = vmatprep.mubr.bf16.mxu0 %v1665
        %2096 = vmatmul.mubr.bf16.gmra.mrb[0].mxu0 %v1610
        %v2097 = vpop.f32.mrb[0].mxu0
        %v2098 = vadd.f32 0.0, %v2097
        %v2099 = vpop.f32.mrb[0].mxu0
        %v2100 = vadd.f32 0.0, %v2099
        %v2101 = vpop.f32.mrb[0].mxu0
        %v2102 = vadd.f32 0.0, %v2101
        %v2103 = vpop.f32.mrb[0].mxu0
        %v2104 = vadd.f32 0.0, %v2103
        %2105 = vmatprep.mubr.bf16.mxu0 %v1673
        %2106 = vmatmul.mubr.bf16.gmra.mrb[0].mxu0 %v1611
        %v2107 = vpop.f32.mrb[0].mxu0
        %v2108 = vadd.f32 0.0, %v2107
        %v2109 = vpop.f32.mrb[0].mxu0
        %v2110 = vadd.f32 0.0, %v2109
        %v2111 = vpop.f32.mrb[0].mxu0
        %v2112 = vadd.f32 0.0, %v2111
        %v2113 = vpop.f32.mrb[0].mxu0
        %v2114 = vadd.f32 0.0, %v2113
        %2115 = vmatprep.mubr.bf16.mxu0 %v1681
        %2116 = vmatmul.mubr.bf16.gmra.mrb[0].mxu0 %v1612
        %v2117 = vpop.f32.mrb[0].mxu0
        %v2118 = vadd.f32 0.0, %v2117
        %v2119 = vpop.f32.mrb[0].mxu0
        %v2120 = vadd.f32 0.0, %v2119
        %v2121 = vpop.f32.mrb[0].mxu0
        %v2122 = vadd.f32 0.0, %v2121
        %v2123 = vpop.f32.mrb[0].mxu0
        %v2124 = vadd.f32 0.0, %v2123
        %2125 = vdwg.mxu0
        %2126 = vmatprep.subr.bf16.mxu0 %v1950
        %2127 = vmatpush1.bf16.msra.mxu0 %v1949
        %2128 = vmatprep.subr.bf16.mxu0 %v1952
        %2129 = vmatpush1.bf16.msra.mxu0 %v1951
        %2130 = vmatprep.subr.bf16.mxu0 %v1954
        %2131 = vmatpush1.bf16.msra.mxu0 %v1953
        %2132 = vmatprep.subr.bf16.mxu0 %v1956
        %2133 = vmatpush1.bf16.msra.mxu0 %v1955
        %2134 = vmatprep.subr.bf16.mxu0 %v1958
        %2135 = vmatpush1.bf16.msra.mxu0 %v1957
        %2136 = vmatprep.subr.bf16.mxu0 %v1960
        %2137 = vmatpush1.bf16.msra.mxu0 %v1959
        %2138 = vmatprep.subr.bf16.mxu0 %v1962
        %2139 = vmatpush1.bf16.msra.mxu0 %v1961
        %2140 = vmatprep.subr.bf16.mxu0 %v1964
        %2141 = vmatpush1.bf16.msra.mxu0 %v1963
        %2142 = vmatprep.subr.bf16.mxu0 0
        %2143 = vmatpush1.bf16.msra.mxu0 0
        %2144 = vmatprep.subr.bf16.mxu0 0
        %2145 = vmatpush1.bf16.msra.mxu0 0
        %2146 = vmatprep.subr.bf16.mxu0 0
        %2147 = vmatpush1.bf16.msra.mxu0 0
        %2148 = vmatprep.subr.bf16.mxu0 0
        %2149 = vmatpush1.bf16.msra.mxu0 0
        %2150 = vmatprep.subr.bf16.mxu0 0
        %2151 = vmatpush1.bf16.msra.mxu0 0
        %2152 = vmatprep.subr.bf16.mxu0 0
        %2153 = vmatpush1.bf16.msra.mxu0 0
        %2154 = vmatprep.subr.bf16.mxu0 0
        %2155 = vmatpush1.bf16.msra.mxu0 0
        %2156 = vmatprep.subr.bf16.mxu0 0
        %2157 = vmatpush1.bf16.msra.mxu0 0
        %2158 = vmatprep.mubr.bf16.mxu0 0
        %2159 = vmatmul.mubr.bf16.gmra.mrb[0].mxu0 %v1701
        %v2160 = vpop.f32.mrb[0].mxu0
        %v2161 = vadd.f32 %v2048, %v2160
        %v2162 = vpop.f32.mrb[0].mxu0
        %v2163 = vadd.f32 %v2050, %v2162
        %v2164 = vpop.f32.mrb[0].mxu0
        %v2165 = vadd.f32 %v2052, %v2164
        %v2166 = vpop.f32.mrb[0].mxu0
        %v2167 = vadd.f32 %v2054, %v2166
        %2168 = vmatprep.mubr.bf16.mxu0 0
        %2169 = vmatmul.mubr.bf16.gmra.mrb[0].mxu0 %v1703
        %v2170 = vpop.f32.mrb[0].mxu0
        %v2171 = vadd.f32 %v2058, %v2170
        %v2172 = vpop.f32.mrb[0].mxu0
        %v2173 = vadd.f32 %v2060, %v2172
        %v2174 = vpop.f32.mrb[0].mxu0
        %v2175 = vadd.f32 %v2062, %v2174
        %v2176 = vpop.f32.mrb[0].mxu0
        %v2177 = vadd.f32 %v2064, %v2176
        %2178 = vmatprep.mubr.bf16.mxu0 0
        %2179 = vmatmul.mubr.bf16.gmra.mrb[0].mxu0 %v1705
        %v2180 = vpop.f32.mrb[0].mxu0
        %v2181 = vadd.f32 %v2068, %v2180
        %v2182 = vpop.f32.mrb[0].mxu0
        %v2183 = vadd.f32 %v2070, %v2182
        %v2184 = vpop.f32.mrb[0].mxu0
        %v2185 = vadd.f32 %v2072, %v2184
        %v2186 = vpop.f32.mrb[0].mxu0
        %v2187 = vadd.f32 %v2074, %v2186
        %2188 = vmatprep.mubr.bf16.mxu0 0
        %2189 = vmatmul.mubr.bf16.gmra.mrb[0].mxu0 %v1707
        %v2190 = vpop.f32.mrb[0].mxu0
        %v2191 = vadd.f32 %v2078, %v2190
        %v2192 = vpop.f32.mrb[0].mxu0
        %v2193 = vadd.f32 %v2080, %v2192
        %v2194 = vpop.f32.mrb[0].mxu0
        %v2195 = vadd.f32 %v2082, %v2194
        %v2196 = vpop.f32.mrb[0].mxu0
        %v2197 = vadd.f32 %v2084, %v2196
        %2198 = vmatprep.mubr.bf16.mxu0 0
        %2199 = vmatmul.mubr.bf16.gmra.mrb[0].mxu0 %v1709
        %v2200 = vpop.f32.mrb[0].mxu0
        %v2201 = vadd.f32 %v2088, %v2200
        %v2202 = vpop.f32.mrb[0].mxu0
        %v2203 = vadd.f32 %v2090, %v2202
        %v2204 = vpop.f32.mrb[0].mxu0
        %v2205 = vadd.f32 %v2092, %v2204
        %v2206 = vpop.f32.mrb[0].mxu0
        %v2207 = vadd.f32 %v2094, %v2206
        %2208 = vmatprep.mubr.bf16.mxu0 0
        %2209 = vmatmul.mubr.bf16.gmra.mrb[0].mxu0 %v1711
        %v2210 = vpop.f32.mrb[0].mxu0
        %v2211 = vadd.f32 %v2098, %v2210
        %v2212 = vpop.f32.mrb[0].mxu0
        %v2213 = vadd.f32 %v2100, %v2212
        %v2214 = vpop.f32.mrb[0].mxu0
        %v2215 = vadd.f32 %v2102, %v2214
        %v2216 = vpop.f32.mrb[0].mxu0
        %v2217 = vadd.f32 %v2104, %v2216
        %2218 = vmatprep.mubr.bf16.mxu0 0
        %2219 = vmatmul.mubr.bf16.gmra.mrb[0].mxu0 %v1713
        %v2220 = vpop.f32.mrb[0].mxu0
        %v2221 = vadd.f32 %v2108, %v2220
        %v2222 = vpop.f32.mrb[0].mxu0
        %v2223 = vadd.f32 %v2110, %v2222
        %v2224 = vpop.f32.mrb[0].mxu0
        %v2225 = vadd.f32 %v2112, %v2224
        %v2226 = vpop.f32.mrb[0].mxu0
        %v2227 = vadd.f32 %v2114, %v2226
        %2228 = vmatprep.mubr.bf16.mxu0 0
        %2229 = vmatmul.mubr.bf16.gmra.mrb[0].mxu0 %v1715
        %v2230 = vpop.f32.mrb[0].mxu0
        %v2231 = vadd.f32 %v2118, %v2230
        %v2232 = vpop.f32.mrb[0].mxu0
        %v2233 = vadd.f32 %v2120, %v2232
        %v2234 = vpop.f32.mrb[0].mxu0
        %v2235 = vadd.f32 %v2122, %v2234
        %v2236 = vpop.f32.mrb[0].mxu0
        %v2237 = vadd.f32 %v2124, %v2236
        %2238 = vdwg.mxu0
        %v2239 = vadd.f32 %v1508, %v2161
        %v2240 = vadd.f32 %v1510, %v2163
        %v2241 = vadd.f32 %v1512, %v2165
        %v2242 = vadd.f32 %v1514, %v2167
        %v2243 = vadd.f32 %v1518, %v2171
        %v2244 = vadd.f32 %v1520, %v2173
        %v2245 = vadd.f32 %v1522, %v2175
        %v2246 = vadd.f32 %v1524, %v2177
        %v2247 = vadd.f32 %v1528, %v2181
        %v2248 = vadd.f32 %v1530, %v2183
        %v2249 = vadd.f32 %v1532, %v2185
        %v2250 = vadd.f32 %v1534, %v2187
        %v2251 = vadd.f32 %v1538, %v2191
        %v2252 = vadd.f32 %v1540, %v2193
        %v2253 = vadd.f32 %v1542, %v2195
        %v2254 = vadd.f32 %v1544, %v2197
        %v2255 = vadd.f32 %v1548, %v2201
        %v2256 = vadd.f32 %v1550, %v2203
        %v2257 = vadd.f32 %v1552, %v2205
        %v2258 = vadd.f32 %v1554, %v2207
        %v2259 = vadd.f32 %v1558, %v2211
        %v2260 = vadd.f32 %v1560, %v2213
        %v2261 = vadd.f32 %v1562, %v2215
        %v2262 = vadd.f32 %v1564, %v2217
        %v2263 = vadd.f32 %v1568, %v2221
        %v2264 = vadd.f32 %v1570, %v2223
        %v2265 = vadd.f32 %v1572, %v2225
        %v2266 = vadd.f32 %v1574, %v2227
        %v2267 = vadd.f32 %v1578, %v2231
        %v2268 = vadd.f32 %v1580, %v2233
        %v2269 = vadd.f32 %v1582, %v2235
        %v2270 = vadd.f32 %v1584, %v2237
        %v2271 = vsel %vm264, 1, 0
        %v2272 = vsel %vm265, 1, 0
        %v2273 = vsel %vm266, 1, 0
        %v2274 = vsel %vm267, 1, 0
        %v2275 = vsel %vm268, 1, 0
        %v2276 = vsel %vm269, 1, 0
        %v2277 = vsel %vm270, 1, 0
        %v2278 = vsel %vm271, 1, 0
        %v2279 = vsel %vm272, 1, 0
        %v2280 = vsel %vm273, 1, 0
        %v2281 = vsel %vm274, 1, 0
        %v2282 = vsel %vm275, 1, 0
        %v2283 = vsel %vm276, 1, 0
        %v2284 = vsel %vm277, 1, 0
        %v2285 = vsel %vm278, 1, 0
        %v2286 = vsel %vm279, 1, 0
        %vm2287 = vcmp.eq.s32.totalorder %v2271, 1
        %vm2288 = vcmp.eq.s32.totalorder %v2272, 1
        %vm2289 = vcmp.eq.s32.totalorder %v2273, 1
        %vm2290 = vcmp.eq.s32.totalorder %v2274, 1
        %vm2291 = vcmp.eq.s32.totalorder %v2275, 1
        %vm2292 = vcmp.eq.s32.totalorder %v2276, 1
        %vm2293 = vcmp.eq.s32.totalorder %v2277, 1
        %vm2294 = vcmp.eq.s32.totalorder %v2278, 1
        %vm2295 = vcmp.eq.s32.totalorder %v2279, 1
        %vm2296 = vcmp.eq.s32.totalorder %v2280, 1
        %vm2297 = vcmp.eq.s32.totalorder %v2281, 1
        %vm2298 = vcmp.eq.s32.totalorder %v2282, 1
        %vm2299 = vcmp.eq.s32.totalorder %v2283, 1
        %vm2300 = vcmp.eq.s32.totalorder %v2284, 1
        %vm2301 = vcmp.eq.s32.totalorder %v2285, 1
        %vm2302 = vcmp.eq.s32.totalorder %v2286, 1
        %v2303 = vsel %vm2287, %v2239, 0.0
        %v2304 = vsel %vm2287, %v2240, 0.0
        %v2305 = vsel %vm2288, %v2241, 0.0
        %v2306 = vsel %vm2288, %v2242, 0.0
        %v2307 = vsel %vm2289, %v2243, 0.0
        %v2308 = vsel %vm2289, %v2244, 0.0
        %v2309 = vsel %vm2290, %v2245, 0.0
        %v2310 = vsel %vm2290, %v2246, 0.0
        %v2311 = vsel %vm2291, %v2247, 0.0
        %v2312 = vsel %vm2291, %v2248, 0.0
        %v2313 = vsel %vm2292, %v2249, 0.0
        %v2314 = vsel %vm2292, %v2250, 0.0
        %v2315 = vsel %vm2293, %v2251, 0.0
        %v2316 = vsel %vm2293, %v2252, 0.0
        %v2317 = vsel %vm2294, %v2253, 0.0
        %v2318 = vsel %vm2294, %v2254, 0.0
        %v2319 = vsel %vm2295, %v2255, 0.0
        %v2320 = vsel %vm2295, %v2256, 0.0
        %v2321 = vsel %vm2296, %v2257, 0.0
        %v2322 = vsel %vm2296, %v2258, 0.0
        %v2323 = vsel %vm2297, %v2259, 0.0
        %v2324 = vsel %vm2297, %v2260, 0.0
        %v2325 = vsel %vm2298, %v2261, 0.0
        %v2326 = vsel %vm2298, %v2262, 0.0
        %v2327 = vsel %vm2299, %v2263, 0.0
        %v2328 = vsel %vm2299, %v2264, 0.0
        %v2329 = vsel %vm2300, %v2265, 0.0
        %v2330 = vsel %vm2300, %v2266, 0.0
        %v2331 = vsel %vm2301, %v2267, 0.0
        %v2332 = vsel %vm2301, %v2268, 0.0
        %v2333 = vsel %vm2302, %v2269, 0.0
        %v2334 = vsel %vm2302, %v2270, 0.0
        %s2335 = sshra.s32 %s199, 3
        %s2336 = sand.u32 %s199, 7
        %s2337 = smul.u32 %s2335, 2
        %s2338 = smul.addr %s2337, 8
        %s2339 = scalar_lea.vmem [#allocation2], %s2338
        %2340 = vst [vmem:[%s2339] sm:$0xff] %v2303
        %vm2341 = vcmask 523264
        %2342 = vst.msk [vmem:[%s2339 + $0x8] sm:$0xff] %vm2341, %v2304
        %2343 = vst [vmem:[%s2339 + $0x10] sm:$0xff] %v2305
        %2344 = vst.msk [vmem:[%s2339 + $0x18] sm:$0xff] %vm2341, %v2306
        %2345 = vst [vmem:[%s2339 + $0x20] sm:$0xff] %v2307
        %2346 = vst.msk [vmem:[%s2339 + $0x28] sm:$0xff] %vm2341, %v2308
        %2347 = vst [vmem:[%s2339 + $0x30] sm:$0xff] %v2309
        %2348 = vst.msk [vmem:[%s2339 + $0x38] sm:$0xff] %vm2341, %v2310
        %2349 = vst [vmem:[%s2339 + $0x40] sm:$0xff] %v2311
        %2350 = vst.msk [vmem:[%s2339 + $0x48] sm:$0xff] %vm2341, %v2312
        %2351 = vst [vmem:[%s2339 + $0x50] sm:$0xff] %v2313
        %2352 = vst.msk [vmem:[%s2339 + $0x58] sm:$0xff] %vm2341, %v2314
        %2353 = vst [vmem:[%s2339 + $0x60] sm:$0xff] %v2315
        %2354 = vst.msk [vmem:[%s2339 + $0x68] sm:$0xff] %vm2341, %v2316
        %2355 = vst [vmem:[%s2339 + $0x70] sm:$0xff] %v2317
        %2356 = vst.msk [vmem:[%s2339 + $0x78] sm:$0xff] %vm2341, %v2318
        %2357 = vst [vmem:[%s2339 + $0x80] sm:$0xff] %v2319
        %2358 = vst.msk [vmem:[%s2339 + $0x88] sm:$0xff] %vm2341, %v2320
        %2359 = vst [vmem:[%s2339 + $0x90] sm:$0xff] %v2321
        %2360 = vst.msk [vmem:[%s2339 + $0x98] sm:$0xff] %vm2341, %v2322
        %2361 = vst [vmem:[%s2339 + $0xa0] sm:$0xff] %v2323
        %2362 = vst.msk [vmem:[%s2339 + $0xa8] sm:$0xff] %vm2341, %v2324
        %2363 = vst [vmem:[%s2339 + $0xb0] sm:$0xff] %v2325
        %2364 = vst.msk [vmem:[%s2339 + $0xb8] sm:$0xff] %vm2341, %v2326
        %2365 = vst [vmem:[%s2339 + $0xc0] sm:$0xff] %v2327
        %2366 = vst.msk [vmem:[%s2339 + $0xc8] sm:$0xff] %vm2341, %v2328
        %2367 = vst [vmem:[%s2339 + $0xd0] sm:$0xff] %v2329
        %2368 = vst.msk [vmem:[%s2339 + $0xd8] sm:$0xff] %vm2341, %v2330
        %2369 = vst [vmem:[%s2339 + $0xe0] sm:$0xff] %v2331
        %2370 = vst.msk [vmem:[%s2339 + $0xe8] sm:$0xff] %vm2341, %v2332
        %2371 = vst [vmem:[%s2339 + $0xf0] sm:$0xff] %v2333
        %2372 = vst.msk [vmem:[%s2339 + $0xf8] sm:$0xff] %vm2341, %v2334
        %v2373 = vld [vmem:[#allocation3] sm:$0x3]
        %v2374 = vadd.f32 %v2303, %v2305
        %v2375 = vadd.f32 %v2374, %v2307
        %v2376 = vadd.f32 %v2375, %v2309
        %v2377 = vadd.f32 %v2376, %v2311
        %v2378 = vadd.f32 %v2377, %v2313
        %v2379 = vadd.f32 %v2378, %v2315
        %v2380 = vadd.f32 %v2379, %v2317
        %v2381 = vadd.f32 %v2380, %v2319
        %v2382 = vadd.f32 %v2381, %v2321
        %v2383 = vadd.f32 %v2382, %v2323
        %v2384 = vadd.f32 %v2383, %v2325
        %v2385 = vadd.f32 %v2384, %v2327
        %v2386 = vadd.f32 %v2385, %v2329
        %v2387 = vadd.f32 %v2386, %v2331
        %v2388 = vadd.f32 %v2387, %v2333
        %v2389 = vrot.slane %v2388, 4
        %v2390 = vadd.f32 %v2388, %v2389
        %v2391 = vrot.slane %v2390, 2
        %v2392 = vadd.f32 %v2390, %v2391
        %v2393 = vrot.slane %v2392, 1
        %v2394 = vadd.f32 %v2392, %v2393
        %v2395 = vsel %vm2341, %v2304, 0.0
        %v2396 = vsel %vm2341, %v2306, 0.0
        %v2397 = vadd.f32 %v2395, %v2396
        %v2398 = vsel %vm2341, %v2308, 0.0
        %v2399 = vadd.f32 %v2397, %v2398
        %v2400 = vsel %vm2341, %v2310, 0.0
        %v2401 = vadd.f32 %v2399, %v2400
        %v2402 = vsel %vm2341, %v2312, 0.0
        %v2403 = vadd.f32 %v2401, %v2402
        %v2404 = vsel %vm2341, %v2314, 0.0
        %v2405 = vadd.f32 %v2403, %v2404
        %v2406 = vsel %vm2341, %v2316, 0.0
        %v2407 = vadd.f32 %v2405, %v2406
        %v2408 = vsel %vm2341, %v2318, 0.0
        %v2409 = vadd.f32 %v2407, %v2408
        %v2410 = vsel %vm2341, %v2320, 0.0
        %v2411 = vadd.f32 %v2409, %v2410
        %v2412 = vsel %vm2341, %v2322, 0.0
        %v2413 = vadd.f32 %v2411, %v2412
        %v2414 = vsel %vm2341, %v2324, 0.0
        %v2415 = vadd.f32 %v2413, %v2414
        %v2416 = vsel %vm2341, %v2326, 0.0
        %v2417 = vadd.f32 %v2415, %v2416
        %v2418 = vsel %vm2341, %v2328, 0.0
        %v2419 = vadd.f32 %v2417, %v2418
        %v2420 = vsel %vm2341, %v2330, 0.0
        %v2421 = vadd.f32 %v2419, %v2420
        %v2422 = vsel %vm2341, %v2332, 0.0
        %v2423 = vadd.f32 %v2421, %v2422
        %v2424 = vsel %vm2341, %v2334, 0.0
        %v2425 = vadd.f32 %v2423, %v2424
        %v2426 = vrot.slane %v2425, 4
        %v2427 = vadd.f32 %v2425, %v2426
        %v2428 = vrot.slane %v2427, 2
        %v2429 = vadd.f32 %v2427, %v2428
        %v2430 = vrot.slane %v2429, 1
        %v2431 = vadd.f32 %v2429, %v2430
        %v2434 = vcombine.low %v2394, %v2431
        %v2436 = vunpack.c.l.s4 1966171168
        %v2437 = vunpack.c.0.s8 %v2436
        %v2438 = vlaneseq
        %v2439 = vshrl.u32 %v2438, 7
        %v2440 = vsub.s32 %v2437, %v2439
        %v2441 = vrot.slane %v2434, %v2440
        %v2443 = vunpack.c.l.s4 1966171168
        %v2444 = vunpack.c.0.s8 %v2443
        %v2445 = vlaneseq
        %v2446 = vshrl.u32 %v2445, 7
        %v2447 = vsub.s32 %v2444, %v2446
        %v2448 = vrot.slane %v2441, %v2447
        %v2450 = vadd.f32 %v2373, %v2448
        %v2451 = vlaneseq
        %vm2452 = vcmp.ge.s32.totalorder %v2451, 0
        %vm2453 = vcmp.lt.s32.totalorder %v2451, 192
        %vm2454 = vmand %vm2452, %vm2453
        %2455 = vst.msk [vmem:[#allocation3] sm:$0x3] %vm2454, %v2450
        %v2456 = vld [vmem:[#allocation4] sm:$0x3]
        %v2457 = vmul.f32 %v2303, %v2303
        %v2458 = vmul.f32 %v2304, %v2304
        %v2459 = vmul.f32 %v2305, %v2305
        %v2460 = vmul.f32 %v2306, %v2306
        %v2461 = vmul.f32 %v2307, %v2307
        %v2462 = vmul.f32 %v2308, %v2308
        %v2463 = vmul.f32 %v2309, %v2309
        %v2464 = vmul.f32 %v2310, %v2310
        %v2465 = vmul.f32 %v2311, %v2311
        %v2466 = vmul.f32 %v2312, %v2312
        %v2467 = vmul.f32 %v2313, %v2313
        %v2468 = vmul.f32 %v2314, %v2314
        %v2469 = vmul.f32 %v2315, %v2315
        %v2470 = vmul.f32 %v2316, %v2316
        %v2471 = vmul.f32 %v2317, %v2317
        %v2472 = vmul.f32 %v2318, %v2318
        %v2473 = vmul.f32 %v2319, %v2319
        %v2474 = vmul.f32 %v2320, %v2320
        %v2475 = vmul.f32 %v2321, %v2321
        %v2476 = vmul.f32 %v2322, %v2322
        %v2477 = vmul.f32 %v2323, %v2323
        %v2478 = vmul.f32 %v2324, %v2324
        %v2479 = vmul.f32 %v2325, %v2325
        %v2480 = vmul.f32 %v2326, %v2326
        %v2481 = vmul.f32 %v2327, %v2327
        %v2482 = vmul.f32 %v2328, %v2328
        %v2483 = vmul.f32 %v2329, %v2329
        %v2484 = vmul.f32 %v2330, %v2330
        %v2485 = vmul.f32 %v2331, %v2331
        %v2486 = vmul.f32 %v2332, %v2332
        %v2487 = vmul.f32 %v2333, %v2333
        %v2488 = vmul.f32 %v2334, %v2334
        %v2489 = vadd.f32 %v2457, %v2459
        %v2490 = vadd.f32 %v2489, %v2461
        %v2491 = vadd.f32 %v2490, %v2463
        %v2492 = vadd.f32 %v2491, %v2465
        %v2493 = vadd.f32 %v2492, %v2467
        %v2494 = vadd.f32 %v2493, %v2469
        %v2495 = vadd.f32 %v2494, %v2471
        %v2496 = vadd.f32 %v2495, %v2473
        %v2497 = vadd.f32 %v2496, %v2475
        %v2498 = vadd.f32 %v2497, %v2477
        %v2499 = vadd.f32 %v2498, %v2479
        %v2500 = vadd.f32 %v2499, %v2481
        %v2501 = vadd.f32 %v2500, %v2483
        %v2502 = vadd.f32 %v2501, %v2485
        %v2503 = vadd.f32 %v2502, %v2487
        %v2504 = vrot.slane %v2503, 4
        %v2505 = vadd.f32 %v2503, %v2504
        %v2506 = vrot.slane %v2505, 2
        %v2507 = vadd.f32 %v2505, %v2506
        %v2508 = vrot.slane %v2507, 1
        %v2509 = vadd.f32 %v2507, %v2508
        %v2510 = vsel %vm2341, %v2458, 0.0
        %v2511 = vsel %vm2341, %v2460, 0.0
        %v2512 = vadd.f32 %v2510, %v2511
        %v2513 = vsel %vm2341, %v2462, 0.0
        %v2514 = vadd.f32 %v2512, %v2513
        %v2515 = vsel %vm2341, %v2464, 0.0
        %v2516 = vadd.f32 %v2514, %v2515
        %v2517 = vsel %vm2341, %v2466, 0.0
        %v2518 = vadd.f32 %v2516, %v2517
        %v2519 = vsel %vm2341, %v2468, 0.0
        %v2520 = vadd.f32 %v2518, %v2519
        %v2521 = vsel %vm2341, %v2470, 0.0
        %v2522 = vadd.f32 %v2520, %v2521
        %v2523 = vsel %vm2341, %v2472, 0.0
        %v2524 = vadd.f32 %v2522, %v2523
        %v2525 = vsel %vm2341, %v2474, 0.0
        %v2526 = vadd.f32 %v2524, %v2525
        %v2527 = vsel %vm2341, %v2476, 0.0
        %v2528 = vadd.f32 %v2526, %v2527
        %v2529 = vsel %vm2341, %v2478, 0.0
        %v2530 = vadd.f32 %v2528, %v2529
        %v2531 = vsel %vm2341, %v2480, 0.0
        %v2532 = vadd.f32 %v2530, %v2531
        %v2533 = vsel %vm2341, %v2482, 0.0
        %v2534 = vadd.f32 %v2532, %v2533
        %v2535 = vsel %vm2341, %v2484, 0.0
        %v2536 = vadd.f32 %v2534, %v2535
        %v2537 = vsel %vm2341, %v2486, 0.0
        %v2538 = vadd.f32 %v2536, %v2537
        %v2539 = vsel %vm2341, %v2488, 0.0
        %v2540 = vadd.f32 %v2538, %v2539
        %v2541 = vrot.slane %v2540, 4
        %v2542 = vadd.f32 %v2540, %v2541
        %v2543 = vrot.slane %v2542, 2
        %v2544 = vadd.f32 %v2542, %v2543
        %v2545 = vrot.slane %v2544, 1
        %v2546 = vadd.f32 %v2544, %v2545
        %v2549 = vcombine.low %v2509, %v2546
        %v2551 = vunpack.c.l.s4 1966171168
        %v2552 = vunpack.c.0.s8 %v2551
        %v2553 = vlaneseq
        %v2554 = vshrl.u32 %v2553, 7
        %v2555 = vsub.s32 %v2552, %v2554
        %v2556 = vrot.slane %v2549, %v2555
        %v2558 = vunpack.c.l.s4 1966171168
        %v2559 = vunpack.c.0.s8 %v2558
        %v2560 = vlaneseq
        %v2561 = vshrl.u32 %v2560, 7
        %v2562 = vsub.s32 %v2559, %v2561
        %v2563 = vrot.slane %v2556, %v2562
        %v2565 = vadd.f32 %v2456, %v2563
        %2566 = vst.msk [vmem:[#allocation4] sm:$0x3] %vm2454, %v2565
      $region40: #{conv_bn_relu.1} parent=35 // pred_fallthru
        _
      %p2567 = scmp.eq.s32.totalorder %s19, 1
      // Predicated region
      $region45: #{conv_bn_relu.1} parent=35 // pred_check
        %p2568 = pneg %p2567
      $region46: #{conv_bn_relu.1} parent=35 // pred_check_branch
        %2570 = sbr.rel (%p2568) target = $region48
      $region47: #{conv_bn_relu.1} parent=35 // pred_region
        %v2571 = vld [vmem:[#allocation3] sm:$0x3]
        %v2572 = vmul.f32 %v2571, 0.0012755102
        %v2573 = vld [vmem:[#allocation4] sm:$0x3]
        %v2574 = vmul.f32 %v2573, 0.0012755102
        %v2575 = vmul.f32 %v2572, %v2572
        %v2576 = vsub.f32 %v2574, %v2575
        %v2577 = vmax.f32 %v2576, 0.0
        %v2578 = vadd.f32 %v2577, 0.001
        %v2579 = vrsqrt.pop %v2578
        %v2580 = vld [vmem:[%s2] sm:$0x3]
        %v2581 = vmul.f32 %v2579, %v2580
        %v2582 = vld [vmem:[%s3] sm:$0x3]
        %v2583 = vmul.f32 %v2572, %v2581
        %v2584 = vsub.f32 %v2582, %v2583
        %s2585 = sshra.s32 %s199, 3
        %s2586 = sand.u32 %s199, 7
        %s2587 = smul.u32 %s2585, 2
        %s2588 = smul.addr %s2587, 8
        %s2589 = scalar_lea.vmem [#allocation2], %s2588
        %v2590 = vld [vmem:[%s2589] sm:$0xff]
        %v2591 = vld [vmem:[%s2589 + $0x8] sm:$0xff]
        %v2592 = vld [vmem:[%s2589 + $0x10] sm:$0xff]
        %v2593 = vld [vmem:[%s2589 + $0x18] sm:$0xff]
        %v2594 = vld [vmem:[%s2589 + $0x20] sm:$0xff]
        %v2595 = vld [vmem:[%s2589 + $0x28] sm:$0xff]
        %v2596 = vld [vmem:[%s2589 + $0x30] sm:$0xff]
        %v2597 = vld [vmem:[%s2589 + $0x38] sm:$0xff]
        %v2598 = vld [vmem:[%s2589 + $0x40] sm:$0xff]
        %v2599 = vld [vmem:[%s2589 + $0x48] sm:$0xff]
        %v2600 = vld [vmem:[%s2589 + $0x50] sm:$0xff]
        %v2601 = vld [vmem:[%s2589 + $0x58] sm:$0xff]
        %v2602 = vld [vmem:[%s2589 + $0x60] sm:$0xff]
        %v2603 = vld [vmem:[%s2589 + $0x68] sm:$0xff]
        %v2604 = vld [vmem:[%s2589 + $0x70] sm:$0xff]
        %v2605 = vld [vmem:[%s2589 + $0x78] sm:$0xff]
        %v2606 = vld [vmem:[%s2589 + $0x80] sm:$0xff]
        %v2607 = vld [vmem:[%s2589 + $0x88] sm:$0xff]
        %v2608 = vld [vmem:[%s2589 + $0x90] sm:$0xff]
        %v2609 = vld [vmem:[%s2589 + $0x98] sm:$0xff]
        %v2610 = vld [vmem:[%s2589 + $0xa0] sm:$0xff]
        %v2611 = vld [vmem:[%s2589 + $0xa8] sm:$0xff]
        %v2612 = vld [vmem:[%s2589 + $0xb0] sm:$0xff]
        %v2613 = vld [vmem:[%s2589 + $0xb8] sm:$0xff]
        %v2614 = vld [vmem:[%s2589 + $0xc0] sm:$0xff]
        %v2615 = vld [vmem:[%s2589 + $0xc8] sm:$0xff]
        %v2616 = vld [vmem:[%s2589 + $0xd0] sm:$0xff]
        %v2617 = vld [vmem:[%s2589 + $0xd8] sm:$0xff]
        %v2618 = vld [vmem:[%s2589 + $0xe0] sm:$0xff]
        %v2619 = vld [vmem:[%s2589 + $0xe8] sm:$0xff]
        %v2620 = vld [vmem:[%s2589 + $0xf0] sm:$0xff]
        %v2621 = vld [vmem:[%s2589 + $0xf8] sm:$0xff]
        %v2623 = vlaneseq
        %v2624 = vshrl.u32 %v2623, 7
        %v2625 = vsub.s32 0, %v2624
        %v2626 = vrot.slane %v2581, %v2625
        %v2627 = vlaneseq
        %v2628 = vshrl.u32 %v2627, 7
        %v2629 = vsub.s32 1, %v2628
        %v2630 = vrot.slane %v2581, %v2629
        %v2633 = vmul.f32 %v2590, %v2626
        %v2634 = vmul.f32 %v2591, %v2630
        %v2635 = vmul.f32 %v2592, %v2626
        %v2636 = vmul.f32 %v2593, %v2630
        %v2637 = vmul.f32 %v2594, %v2626
        %v2638 = vmul.f32 %v2595, %v2630
        %v2639 = vmul.f32 %v2596, %v2626
        %v2640 = vmul.f32 %v2597, %v2630
        %v2641 = vmul.f32 %v2598, %v2626
        %v2642 = vmul.f32 %v2599, %v2630
        %v2643 = vmul.f32 %v2600, %v2626
        %v2644 = vmul.f32 %v2601, %v2630
        %v2645 = vmul.f32 %v2602, %v2626
        %v2646 = vmul.f32 %v2603, %v2630
        %v2647 = vmul.f32 %v2604, %v2626
        %v2648 = vmul.f32 %v2605, %v2630
        %v2649 = vmul.f32 %v2606, %v2626
        %v2650 = vmul.f32 %v2607, %v2630
        %v2651 = vmul.f32 %v2608, %v2626
        %v2652 = vmul.f32 %v2609, %v2630
        %v2653 = vmul.f32 %v2610, %v2626
        %v2654 = vmul.f32 %v2611, %v2630
        %v2655 = vmul.f32 %v2612, %v2626
        %v2656 = vmul.f32 %v2613, %v2630
        %v2657 = vmul.f32 %v2614, %v2626
        %v2658 = vmul.f32 %v2615, %v2630
        %v2659 = vmul.f32 %v2616, %v2626
        %v2660 = vmul.f32 %v2617, %v2630
        %v2661 = vmul.f32 %v2618, %v2626
        %v2662 = vmul.f32 %v2619, %v2630
        %v2663 = vmul.f32 %v2620, %v2626
        %v2664 = vmul.f32 %v2621, %v2630
        %v2666 = vlaneseq
        %v2667 = vshrl.u32 %v2666, 7
        %v2668 = vsub.s32 0, %v2667
        %v2669 = vrot.slane %v2584, %v2668
        %v2670 = vlaneseq
        %v2671 = vshrl.u32 %v2670, 7
        %v2672 = vsub.s32 1, %v2671
        %v2673 = vrot.slane %v2584, %v2672
        %v2676 = vadd.f32 %v2633, %v2669
        %v2677 = vadd.f32 %v2634, %v2673
        %v2678 = vadd.f32 %v2635, %v2669
        %v2679 = vadd.f32 %v2636, %v2673
        %v2680 = vadd.f32 %v2637, %v2669
        %v2681 = vadd.f32 %v2638, %v2673
        %v2682 = vadd.f32 %v2639, %v2669
        %v2683 = vadd.f32 %v2640, %v2673
        %v2684 = vadd.f32 %v2641, %v2669
        %v2685 = vadd.f32 %v2642, %v2673
        %v2686 = vadd.f32 %v2643, %v2669
        %v2687 = vadd.f32 %v2644, %v2673
        %v2688 = vadd.f32 %v2645, %v2669
        %v2689 = vadd.f32 %v2646, %v2673
        %v2690 = vadd.f32 %v2647, %v2669
        %v2691 = vadd.f32 %v2648, %v2673
        %v2692 = vadd.f32 %v2649, %v2669
        %v2693 = vadd.f32 %v2650, %v2673
        %v2694 = vadd.f32 %v2651, %v2669
        %v2695 = vadd.f32 %v2652, %v2673
        %v2696 = vadd.f32 %v2653, %v2669
        %v2697 = vadd.f32 %v2654, %v2673
        %v2698 = vadd.f32 %v2655, %v2669
        %v2699 = vadd.f32 %v2656, %v2673
        %v2700 = vadd.f32 %v2657, %v2669
        %v2701 = vadd.f32 %v2658, %v2673
        %v2702 = vadd.f32 %v2659, %v2669
        %v2703 = vadd.f32 %v2660, %v2673
        %v2704 = vadd.f32 %v2661, %v2669
        %v2705 = vadd.f32 %v2662, %v2673
        %v2706 = vadd.f32 %v2663, %v2669
        %v2707 = vadd.f32 %v2664, %v2673
        %v2708 = vmax.f32 %v2676, 0.0
        %v2709 = vmax.f32 %v2677, 0.0
        %v2710 = vmax.f32 %v2678, 0.0
        %v2711 = vmax.f32 %v2679, 0.0
        %v2712 = vmax.f32 %v2680, 0.0
        %v2713 = vmax.f32 %v2681, 0.0
        %v2714 = vmax.f32 %v2682, 0.0
        %v2715 = vmax.f32 %v2683, 0.0
        %v2716 = vmax.f32 %v2684, 0.0
        %v2717 = vmax.f32 %v2685, 0.0
        %v2718 = vmax.f32 %v2686, 0.0
        %v2719 = vmax.f32 %v2687, 0.0
        %v2720 = vmax.f32 %v2688, 0.0
        %v2721 = vmax.f32 %v2689, 0.0
        %v2722 = vmax.f32 %v2690, 0.0
        %v2723 = vmax.f32 %v2691, 0.0
        %v2724 = vmax.f32 %v2692, 0.0
        %v2725 = vmax.f32 %v2693, 0.0
        %v2726 = vmax.f32 %v2694, 0.0
        %v2727 = vmax.f32 %v2695, 0.0
        %v2728 = vmax.f32 %v2696, 0.0
        %v2729 = vmax.f32 %v2697, 0.0
        %v2730 = vmax.f32 %v2698, 0.0
        %v2731 = vmax.f32 %v2699, 0.0
        %v2732 = vmax.f32 %v2700, 0.0
        %v2733 = vmax.f32 %v2701, 0.0
        %v2734 = vmax.f32 %v2702, 0.0
        %v2735 = vmax.f32 %v2703, 0.0
        %v2736 = vmax.f32 %v2704, 0.0
        %v2737 = vmax.f32 %v2705, 0.0
        %v2738 = vmax.f32 %v2706, 0.0
        %v2739 = vmax.f32 %v2707, 0.0
        %2740 = vst [vmem:[%s195] sm:$0xff] %v2708
        %vm2741 = vcmask 523264
        %2742 = vst.msk [vmem:[%s195 + $0x8] sm:$0xff] %vm2741, %v2709
        %2743 = vst [vmem:[%s195 + $0x10] sm:$0xff] %v2710
        %2744 = vst.msk [vmem:[%s195 + $0x18] sm:$0xff] %vm2741, %v2711
        %2745 = vst [vmem:[%s195 + $0x20] sm:$0xff] %v2712
        %2746 = vst.msk [vmem:[%s195 + $0x28] sm:$0xff] %vm2741, %v2713
        %2747 = vst [vmem:[%s195 + $0x30] sm:$0xff] %v2714
        %2748 = vst.msk [vmem:[%s195 + $0x38] sm:$0xff] %vm2741, %v2715
        %2749 = vst [vmem:[%s195 + $0x40] sm:$0xff] %v2716
        %2750 = vst.msk [vmem:[%s195 + $0x48] sm:$0xff] %vm2741, %v2717
        %2751 = vst [vmem:[%s195 + $0x50] sm:$0xff] %v2718
        %2752 = vst.msk [vmem:[%s195 + $0x58] sm:$0xff] %vm2741, %v2719
        %2753 = vst [vmem:[%s195 + $0x60] sm:$0xff] %v2720
        %2754 = vst.msk [vmem:[%s195 + $0x68] sm:$0xff] %vm2741, %v2721
        %2755 = vst [vmem:[%s195 + $0x70] sm:$0xff] %v2722
        %2756 = vst.msk [vmem:[%s195 + $0x78] sm:$0xff] %vm2741, %v2723
        %2757 = vst [vmem:[%s195 + $0x80] sm:$0xff] %v2724
        %2758 = vst.msk [vmem:[%s195 + $0x88] sm:$0xff] %vm2741, %v2725
        %2759 = vst [vmem:[%s195 + $0x90] sm:$0xff] %v2726
        %2760 = vst.msk [vmem:[%s195 + $0x98] sm:$0xff] %vm2741, %v2727
        %2761 = vst [vmem:[%s195 + $0xa0] sm:$0xff] %v2728
        %2762 = vst.msk [vmem:[%s195 + $0xa8] sm:$0xff] %vm2741, %v2729
        %2763 = vst [vmem:[%s195 + $0xb0] sm:$0xff] %v2730
        %2764 = vst.msk [vmem:[%s195 + $0xb8] sm:$0xff] %vm2741, %v2731
        %2765 = vst [vmem:[%s195 + $0xc0] sm:$0xff] %v2732
        %2766 = vst.msk [vmem:[%s195 + $0xc8] sm:$0xff] %vm2741, %v2733
        %2767 = vst [vmem:[%s195 + $0xd0] sm:$0xff] %v2734
        %2768 = vst.msk [vmem:[%s195 + $0xd8] sm:$0xff] %vm2741, %v2735
        %2769 = vst [vmem:[%s195 + $0xe0] sm:$0xff] %v2736
        %2770 = vst.msk [vmem:[%s195 + $0xe8] sm:$0xff] %vm2741, %v2737
        %2771 = vst [vmem:[%s195 + $0xf0] sm:$0xff] %v2738
        %2772 = vst.msk [vmem:[%s195 + $0xf8] sm:$0xff] %vm2741, %v2739
      $region48: #{conv_bn_relu.1} parent=35 // pred_fallthru
        _
      %s2773 = smul.u32 %s20, %s19
      %s2774 = smul.u32 16, %s2773
      %p2775 = scmp.lt.s32.totalorder %s2774, 111
      %s2776 = scalar_select %p2775, %s2774, 111
      %s2777 = smul.addr %s2776, 2
      %s2778 = smul.addr %s2777, 8
      %s2779 = scalar_lea.vmem %s4, %s2778
      // Predicated region
      $region49: #{conv_bn_relu.1} parent=35 // pred_check
        %p2780 = pneg %p131
      $region50: #{conv_bn_relu.1} parent=35 // pred_check_branch
        %2782 = sbr.rel (%p2780) target = $region52
      $region51: #{conv_bn_relu.1} parent=35 // pred_region
        %s2783 = smul.u32 %s20, %s19
        %s2784 = smul.u32 16, %s2783
      $region52: #{conv_bn_relu.1} parent=35 // pred_fallthru
        _
    $region36: #{conv_bn_relu.1} parent=5 // pred_fallthru
      _
    %p2785 = scmp.le.s32.totalorder 2, %s10
    // Predicated region
    $region53: #{conv_bn_relu.1} parent=5 // pred_check
      %p2786 = pneg %p2785
    $region54: #{conv_bn_relu.1} parent=5 // pred_check_branch
      %2788 = sbr.rel (%p2786) target = $region56
    $region55: #{conv_bn_relu.1} parent=5 // pred_region
      %s2789 = ssub.s32 %s10, 2
      // Predicated region
      $region57: #{conv_bn_relu.1} parent=55 // pred_check
        %p2790 = pneg %p137
      $region58: #{conv_bn_relu.1} parent=55 // pred_check_branch
        %2792 = sbr.rel (%p2790) target = $region60
      $region59: #{conv_bn_relu.1} parent=55 // pred_region
        %s2793 = smul.u32 %s22, %s21
        %s2794 = smul.u32 16, %s2793
        %p2795 = scmp.lt.s32.totalorder %s2794, 111
        %s2796 = scalar_select %p2795, %s2794, 111
        %s2797 = smul.addr %s2796, 2
        %s2798 = smul.addr %s2797, 8
        %s2799 = scalar_lea.vmem %s4, %s2798
      $region60: #{conv_bn_relu.1} parent=55 // pred_fallthru
        _
    $region56: #{conv_bn_relu.1} parent=5 // pred_fallthru
      _
  $region6: #{conv_bn_relu.1} parent=0 // loop_footer
    %s14 = sadd.s32 1, %s10
  $region7: #{conv_bn_relu.1} parent=0 // loop_footer_branch
    %9 = sbr.rel target = $region3
  $region8: #{conv_bn_relu.1} parent=0 // loop_exit
    _

</llo_original>
